<compile_context>
chip_gen: v7x
topology: tpu7x:2x2x1
jax: 0.10.0
libtpu: 0.0.40
codegen_flags: <defaults>
</compile_context>

<pallas_src>
import math

import jax
import jax.numpy as jnp
from jax.experimental import pallas as pl
from jax.experimental.pallas import tpu as pltpu

# ------------- small, deterministic hyper-params (Generator's G_args) --------
VOCAB_SIZE = 16          # args.vocab_size
EMB_DIM = 32             # args.emb_dim  (ninp)
NHEAD = 4                # args.nhead
NHID = 64                # args.nhid
NUM_ENCODE_LAYERS = 2    # args.num_encode_layers
BATCH = 2
SEQ = 8
LN_EPS = 1e-5
NEG_INF = -1e30          # additive causal-mask value (stand-in for -inf)


def _round8(x):
    return (x + 7) // 8 * 8


# ---------------- packed-slab row offsets (static; sliced in-kernel) ----------
# per-layer weight slab wslab: (NUM_ENCODE_LAYERS, L_ROWS, L_COLS) f32
L_COLS = 3 * EMB_DIM                      # 96 lanes
L_WQKV = 0                                # (E, 3E)   in_proj_weight.T (Q cols pre-scaled)
L_WO = L_WQKV + EMB_DIM                   # (E, E)    out_proj.weight.T
L_W1 = L_WO + EMB_DIM                     # (E, NHID) linear1.weight.T
L_W2 = L_W1 + EMB_DIM                     # (NHID, E) linear2.weight.T
L_BIAS = L_W2 + NHID                      # 8 one-row vectors: bqkv,bo,g1,b1,g2,b2,bl1,bl2
L_ROWS = _round8(L_BIAS + 8)              # 168

# model/constant slab mslab: (M_ROWS, EMB_DIM) f32
M_EMB = 0                                 # (V, E)     embedding * sqrt(E)
M_PE = M_EMB + VOCAB_SIZE                 # (B*S, E)   positional-encoding rows (b-major)
M_DECW = M_PE + BATCH * SEQ               # (E, V)     decoder.weight.T (lanes 0:V)
M_DECB = M_DECW + EMB_DIM                 # (1, V)     decoder.bias
M_HSUM = _round8(M_DECB + 1)              # (E, H)     per-head column-sum indicator
M_HEXP = M_HSUM + EMB_DIM                 # (H, E)     == hsum.T (single indicator, transposed host-side)
M_MASK = _round8(M_HEXP + NHEAD)          # (B*B*S, H) additive causal mask over the B axis
M_ROWS = _round8(M_MASK + BATCH * BATCH * SEQ)   # 144


def _vmem_spec():
    # whole-array block resident in VMEM (shapes are tiny, no grid needed)
    return pl.BlockSpec(memory_space=pltpu.MemorySpace.VMEM)


# ----------------------------- in-kernel helpers ------------------------------
def _load_layer(wref, l):
    """Static slices into the packed per-layer slab (row starts are compile-time)."""
    E, NH = EMB_DIM, NHID
    wqkv_t = wref[l, L_WQKV:L_WQKV + E, 0:3 * E]
    wo_t = wref[l, L_WO:L_WO + E, 0:E]
    w1_t = wref[l, L_W1:L_W1 + E, 0:NH]
    w2_t = wref[l, L_W2:L_W2 + NH, 0:E]
    bqkv = wref[l, L_BIAS + 0:L_BIAS + 1, 0:3 * E]
    bo = wref[l, L_BIAS + 1:L_BIAS + 2, 0:E]
    g1 = wref[l, L_BIAS + 2:L_BIAS + 3, 0:E]
    b1 = wref[l, L_BIAS + 3:L_BIAS + 4, 0:E]
    g2 = wref[l, L_BIAS + 4:L_BIAS + 5, 0:E]
    b2 = wref[l, L_BIAS + 5:L_BIAS + 6, 0:E]
    bl1 = wref[l, L_BIAS + 6:L_BIAS + 7, 0:NH]
    bl2 = wref[l, L_BIAS + 7:L_BIAS + 8, 0:E]
    return wqkv_t, bqkv, wo_t, bo, g1, b1, g2, b2, w1_t, bl1, w2_t, bl2


def _encoder_layer(x2, mask2, hsum, hexp, B, S, nhead,
                   wqkv_t, bqkv, wo_t, bo, g1, b1, g2, b2, w1_t, bl1, w2_t, bl2):
    """One nn.TransformerEncoderLayer (post-norm, ReLU FFN, dropout = eval identity).

    x2: (B*S, E) activations, row r = b*S + s.  Attention is over the B axis
    (causal), batched over S.  1/sqrt(Dh) is already folded into the Q weights.
    """
    BS, E = x2.shape
    H = nhead

    # fused QKV projection: one (B*S, E) @ (E, 3E) MXU matmul
    qkv = jnp.dot(x2, wqkv_t, preferred_element_type=jnp.float32) + bqkv
    q = qkv[:, 0 * E:1 * E].reshape(B, S, E)
    k = qkv[:, 1 * E:2 * E].reshape(B, S, E)
    v = qkv[:, 2 * E:3 * E].reshape(B, S, E)

    # scores s[bq,bk,s,h] = sum_{d in head h} q[bq,s,d] * k[bk,s,d]
    # (VPU broadcast-multiply; per-head sum via indicator matmul, K = E)
    e = q[:, None, :, :] * k[None, :, :, :]                         # (B, B, S, E)
    sh = jnp.dot(e.reshape(B * B * S, E), hsum,
                 preferred_element_type=jnp.float32)                # (B*B*S, H)
    s = (sh + mask2).reshape(B, B, S, H)

    # softmax over the key-b axis (axis=1), denominator on the EUP
    m = jnp.max(s, axis=1, keepdims=True)
    p = jnp.exp(s - m)
    p = p * pl.reciprocal(jnp.sum(p, axis=1, keepdims=True), approx=True)

    # expand per-head weights across their Dh columns (hexp == hsum.T) and combine with V
    pw = jnp.dot(p.reshape(B * B * S, H), hexp,
                 preferred_element_type=jnp.float32).reshape(B, B, S, E)
    o = jnp.sum(pw * v[None, :, :, :], axis=1)                      # (B, S, E)

    # out-projection: ONE full-width (B*S, E) @ (E, E) matmul
    attn = jnp.dot(o.reshape(BS, E), wo_t,
                   preferred_element_type=jnp.float32) + bo

    # residual + LayerNorm1  (var = E[y^2] - mu^2 : independent reductions)
    y = x2 + attn
    mu = jnp.mean(y, axis=-1, keepdims=True)
    var = jnp.mean(y * y, axis=-1, keepdims=True) - mu * mu
    y = (y - mu) * jax.lax.rsqrt(var + LN_EPS) * g1 + b1

    # feed-forward: Linear(E, nhid) -> ReLU -> Linear(nhid, E)
    hmid = jnp.maximum(
        jnp.dot(y, w1_t, preferred_element_type=jnp.float32) + bl1, 0.0)
    ff = jnp.dot(hmid, w2_t, preferred_element_type=jnp.float32) + bl2

    # residual + LayerNorm2
    z = y + ff
    mu2 = jnp.mean(z, axis=-1, keepdims=True)
    var2 = jnp.mean(z * z, axis=-1, keepdims=True) - mu2 * mu2
    return (z - mu2) * jax.lax.rsqrt(var2 + LN_EPS) * g2 + b2


# ----------------------------- fused Pallas kernel ----------------------------
def generator_kernel(tok_ref, wslab_ref, mslab_ref, o_ref):
    """Entire Generator.forward in one kernel: embedding -> PE -> encoder x2 ->
    decoder Linear -> log_softmax(dim=S), output written in (B*S, V) order."""
    B, S, E, V, H = BATCH, SEQ, EMB_DIM, VOCAB_SIZE, NHEAD
    BS = B * S

    # ---- unpack packed constant slab with static slices (zero runtime cost) --
    emb_sqrt = mslab_ref[M_EMB:M_EMB + V, :]                        # (V, E), * sqrt(E) folded
    pe = mslab_ref[M_PE:M_PE + BS, :]                               # (B*S, E)
    dec_wt = mslab_ref[M_DECW:M_DECW + E, 0:V]                      # (E, V)
    dec_b = mslab_ref[M_DECB:M_DECB + 1, 0:V]                       # (1, V)
    hsum = mslab_ref[M_HSUM:M_HSUM + E, 0:H]                        # (E, H)
    hexp = mslab_ref[M_HEXP:M_HEXP + H, 0:E]                        # (H, E) == hsum.T
    mask2 = mslab_ref[M_MASK:M_MASK + B * B * S, 0:H]               # (B*B*S, H)

    # ---- embedding lookup as a one-hot matmul (fused; no XLA gather) --------
    ids = tok_ref[...]                                              # (B*S, 1) int32
    tok_iota = jax.lax.broadcasted_iota(jnp.int32, (BS, V), 1)
    onehot = jnp.where(ids == tok_iota, 1.0, 0.0)                   # (B*S, V) f32
    x2 = jnp.dot(onehot, emb_sqrt, preferred_element_type=jnp.float32) + pe
    # nn.Dropout layers: eval-mode identity (dropout is stochastic at train time)

    # ---- encoder stack -------------------------------------------------------
    for l in range(NUM_ENCODE_LAYERS):
        x2 = _encoder_layer(x2, mask2, hsum, hexp, B, S, H,
                            *_load_layer(wslab_ref, l))

    # ---- decoder Linear + log_softmax over the S axis (PyTorch dim=1) --------
    logits = jnp.dot(x2, dec_wt, preferred_element_type=jnp.float32) + dec_b
    lg = logits.reshape(B, S, V)
    m = jnp.max(lg, axis=1, keepdims=True)
    zz = lg - m
    lse = jnp.log(jnp.sum(jnp.exp(zz), axis=1, keepdims=True))
    # NOTE: V=16 < 128 lanes -> masked partial store; negligible at this size.
    o_ref[...] = (zz - lse).reshape(BS, V)


# ----------------------------- pallas_call wrapper ----------------------------
def generator_forward(wslab, mslab, tok):
    """tok: (B*S, 1) int32 token ids (b-major rows). wslab/mslab: packed params."""
    return pl.pallas_call(
        generator_kernel,
        out_shape=jax.ShapeDtypeStruct((BATCH * SEQ, VOCAB_SIZE), jnp.float32),
        in_specs=[_vmem_spec(), _vmem_spec(), _vmem_spec()],
        out_specs=_vmem_spec(),
    )(tok, wslab, mslab)
    # NOTE(v7x): grid-less single-TC design is intentional at this toy size; at
    # larger B/S/E switch rows to s-major and add an S grid axis marked
    # dimension_semantics=("parallel",), re-deriving VMEM budget vs 64 MiB.
    # NOTE(v6e): if shapes grow, pad E/NHID toward 128/256 and cast MXU
    # operands (not accumulators) to bf16; pointless at E=32.


# ----------------------------- host-side parameter packing --------------------
def pack_params(params):
    """Pack all parameters + in-kernel constants into 2 f32 slabs (3 DMAs total
    with the token input, vs ~30 before).  Also folds the 1/sqrt(Dh) attention
    scale into the Q projection and sqrt(E) into the embedding table."""
    E, H, V, NH, B, S = EMB_DIM, NHEAD, VOCAB_SIZE, NHID, BATCH, SEQ
    Dh = E // H
    scale = 1.0 / math.sqrt(Dh)

    # ---- per-layer weight slab (NUM_ENCODE_LAYERS, L_ROWS, L_COLS) ----------
    slabs = []
    for lw in params['layers']:
        wqkv_t = lw['wqkv_t'].at[:, :E].multiply(scale)   # fold scale into Q weights
        bqkv = lw['bqkv'].at[:, :E].multiply(scale)       # ... and Q bias
        s9 = jnp.zeros((L_ROWS, L_COLS), jnp.float32)
        s9 = s9.at[L_WQKV:L_WQKV + E, 0:3 * E].set(wqkv_t)
        s9 = s9.at[L_WO:L_WO + E, 0:E].set(lw['wo_t'])
        s9 = s9.at[L_W1:L_W1 + E, 0:NH].set(lw['w1_t'])
        s9 = s9.at[L_W2:L_W2 + NH, 0:E].set(lw['w2_t'])
        s9 = s9.at[L_BIAS + 0, 0:3 * E].set(bqkv[0])
        s9 = s9.at[L_BIAS + 1, 0:E].set(lw['bo'][0])
        s9 = s9.at[L_BIAS + 2, 0:E].set(lw['g1'][0])
        s9 = s9.at[L_BIAS + 3, 0:E].set(lw['b1'][0])
        s9 = s9.at[L_BIAS + 4, 0:E].set(lw['g2'][0])
        s9 = s9.at[L_BIAS + 5, 0:E].set(lw['b2'][0])
        s9 = s9.at[L_BIAS + 6, 0:NH].set(lw['bl1'][0])
        s9 = s9.at[L_BIAS + 7, 0:E].set(lw['bl2'][0])
        slabs.append(s9)
    wslab = jnp.stack(slabs)

    # ---- model / constant slab (M_ROWS, E) -----------------------------------
    mslab = jnp.zeros((M_ROWS, E), jnp.float32)
    mslab = mslab.at[M_EMB:M_EMB + V, :].set(params['emb'] * math.sqrt(E))
    mslab = mslab.at[M_PE:M_PE + B * S, :].set(params['pe_rows'])
    mslab = mslab.at[M_DECW:M_DECW + E, 0:V].set(params['dec_w_t'])
    mslab = mslab.at[M_DECB, 0:V].set(params['dec_b'][0])
    # single head-indicator matrix; hexp is just its transpose (free host-side)
    hsum = (jnp.arange(E)[:, None] // Dh == jnp.arange(H)[None, :]).astype(jnp.float32)
    mslab = mslab.at[M_HSUM:M_HSUM + E, 0:H].set(hsum)
    mslab = mslab.at[M_HEXP:M_HEXP + H, 0:E].set(hsum.T)
    # additive causal mask over the B axis, flat rows r = bq*(B*S) + bk*S + s
    r = jnp.arange(B * B * S)
    bq = r // (B * S)
    bk = (r // S) % B
    mask_col = jnp.where(bk <= bq, 0.0, NEG_INF)[:, None]
    mslab = mslab.at[M_MASK:M_MASK + B * B * S, 0:H].set(
        jnp.broadcast_to(mask_col, (B * B * S, H)))
    return wslab, mslab


# ----------------------------- parameters (deterministic) ---------------------
def init_params(key):
    ks = jax.random.split(key, 4 + NUM_ENCODE_LAYERS)
    initrange = 0.1
    params = {}
    # nn.Embedding weight ~ U(-0.1, 0.1)  (TransformerModel.init_weights)
    params['emb'] = jax.random.uniform(ks[0], (VOCAB_SIZE, EMB_DIM),
                                       jnp.float32, -initrange, initrange)
    # decoder Linear: weight ~ U(-0.1, 0.1), bias = 0
    params['dec_w_t'] = jax.random.uniform(ks[1], (VOCAB_SIZE, EMB_DIM),
                                           jnp.float32, -initrange, initrange).T
    params['dec_b'] = jnp.zeros((1, VOCAB_SIZE), jnp.float32)

    # sinusoidal positional-encoding table; pe[b] added to every s of row b,
    # pre-expanded to the kernel's (B*S, E) b-major row layout.
    max_len = 64
    position = jnp.arange(max_len, dtype=jnp.float32)[:, None]
    div_term = jnp.exp(jnp.arange(0, EMB_DIM, 2, dtype=jnp.float32)
                       * (-math.log(10000.0) / EMB_DIM))
    pe = jnp.zeros((max_len, EMB_DIM), jnp.float32)
    pe = pe.at[:, 0::2].set(jnp.sin(position * div_term))
    pe = pe.at[:, 1::2].set(jnp.cos(position * div_term))
    params['pe_rows'] = jnp.broadcast_to(
        pe[:BATCH, None, :], (BATCH, SEQ, EMB_DIM)).reshape(BATCH * SEQ, EMB_DIM)

    def nrm(k, shape, scale=0.05):
        return scale * jax.random.normal(k, shape, jnp.float32)

    layers = []
    for l in range(NUM_ENCODE_LAYERS):
        lk = jax.random.split(ks[4 + l], 8)
        layers.append(dict(
            wqkv_t=nrm(lk[0], (3 * EMB_DIM, EMB_DIM)).T,   # in_proj_weight.T
            bqkv=nrm(lk[1], (1, 3 * EMB_DIM)),
            wo_t=nrm(lk[2], (EMB_DIM, EMB_DIM)).T,         # out_proj.weight.T
            bo=nrm(lk[3], (1, EMB_DIM)),
            g1=jnp.ones((1, EMB_DIM), jnp.float32),        # LayerNorm defaults
            b1=jnp.zeros((1, EMB_DIM), jnp.float32),
            g2=jnp.ones((1, EMB_DIM), jnp.float32),
            b2=jnp.zeros((1, EMB_DIM), jnp.float32),
            w1_t=nrm(lk[4], (NHID, EMB_DIM)).T,            # linear1.weight.T
            bl1=nrm(lk[5], (1, NHID)),
            w2_t=nrm(lk[6], (EMB_DIM, NHID)).T,            # linear2.weight.T
            bl2=nrm(lk[7], (1, EMB_DIM)),
        ))
    params['layers'] = layers
    return params


# ----------------------------- pure-JAX reference (for sanity check) ----------
def reference_forward(params, inp):
    B, S, _ = inp.shape
    E, H = EMB_DIM, NHEAD
    Dh = E // H
    tok = inp[:, :, 0]
    x = jnp.take(params['emb'], tok, axis=0) * math.sqrt(E)         # (B,S,E)
    x = x + params['pe_rows'].reshape(B, S, E)
    idx = jnp.arange(B)
    mask = jnp.where(idx[None, :] <= idx[:, None], 0.0, NEG_INF)    # (B,B)
    for lw in params['layers']:
        x2 = x.reshape(B * S, E)
        qkv = x2 @ lw['wqkv_t'] + lw['bqkv']
        qh = qkv[:, :E].reshape(B, S, H, Dh)
        kh = qkv[:, E:2 * E].reshape(B, S, H, Dh)
        vh = qkv[:, 2 * E:].reshape(B, S, H, Dh)
        s = jnp.einsum('ishd,jshd->shij', qh, kh) / math.sqrt(Dh)
        s = s + mask[None, None, :, :]
        p = jax.nn.softmax(s, axis=-1)
        o = jnp.einsum('shij,jshd->ishd', p, vh).reshape(B * S, E)
        a = o @ lw['wo_t'] + lw['bo']
        y = x2 + a
        mu = y.mean(-1, keepdims=True)
        var = ((y - mu) ** 2).mean(-1, keepdims=True)
        y = (y - mu) / jnp.sqrt(var + LN_EPS) * lw['g1'] + lw['b1']
        h1 = jnp.maximum(y @ lw['w1_t'] + lw['bl1'], 0.0)
        z = y + (h1 @ lw['w2_t'] + lw['bl2'])
        mu2 = z.mean(-1, keepdims=True)
        var2 = ((z - mu2) ** 2).mean(-1, keepdims=True)
        x = ((z - mu2) / jnp.sqrt(var2 + LN_EPS) * lw['g2'] + lw['b2']).reshape(B, S, E)
    logits = x.reshape(B * S, E) @ params['dec_w_t'] + params['dec_b']
    out = jax.nn.log_softmax(logits.reshape(B, S, VOCAB_SIZE), axis=1)
    return out.reshape(B * S, VOCAB_SIZE)


# TODO(synk): Generator.step / sample / init_hidden reference attributes
# (self.emb, self.lstm, self.fc) that the module never defines; only forward()
# is implemented here.

if __name__ == "__main__":
    key = jax.random.PRNGKey(0)
    pkey, dkey = jax.random.split(key)
    params = init_params(pkey)
    wslab, mslab = pack_params(params)

    inp = jax.random.randint(dkey, (BATCH, SEQ, 2), 0, VOCAB_SIZE, dtype=jnp.int32)
    tok = inp[:, :, 0].reshape(BATCH * SEQ, 1)   # channel 1 unused by forward

    pred = jax.jit(generator_forward)(wslab, mslab, tok)
    pred = jax.block_until_ready(pred)

    assert pred.shape == (BATCH * SEQ, VOCAB_SIZE), pred.shape
    assert bool(jnp.all(jnp.isfinite(pred)))
    ref = reference_forward(params, inp)
    assert bool(jnp.allclose(pred, ref, atol=2e-2, rtol=2e-2)), \
        float(jnp.max(jnp.abs(pred - ref)))
    print("KERNEL_OK")
</pallas_src>

<mosaic_0001>
module attributes {stable_mosaic.version = 11 : i64} {
  func.func @generator_kernel(%arg0: memref<16x1xi32, #tpu.memory_space<vmem>>, %arg1: memref<2x168x96xf32, #tpu.memory_space<vmem>>, %arg2: memref<144x32xf32, #tpu.memory_space<vmem>>, %arg3: memref<16x16xf32, #tpu.memory_space<vmem>>) attributes {dimension_semantics = [], scalar_prefetch = 0 : i64, scratch_operands = 0 : i64, tpu.core_type = #tpu.core_type<tc>} {
    %c0 = arith.constant 0 : index
    %c0_0 = arith.constant 0 : index
    %0 = vector.load %arg2[%c0, %c0_0] : memref<144x32xf32, #tpu.memory_space<vmem>>, vector<16x32xf32>
    %c16 = arith.constant 16 : index
    %c0_1 = arith.constant 0 : index
    %1 = vector.load %arg2[%c16, %c0_1] : memref<144x32xf32, #tpu.memory_space<vmem>>, vector<16x32xf32>
    %c32 = arith.constant 32 : index
    %c0_2 = arith.constant 0 : index
    %2 = vector.load %arg2[%c32, %c0_2] : memref<144x32xf32, #tpu.memory_space<vmem>>, vector<32x16xf32>
    %c64 = arith.constant 64 : index
    %c0_3 = arith.constant 0 : index
    %3 = vector.load %arg2[%c64, %c0_3] : memref<144x32xf32, #tpu.memory_space<vmem>>, vector<1x16xf32>
    %c72 = arith.constant 72 : index
    %c0_4 = arith.constant 0 : index
    %4 = vector.load %arg2[%c72, %c0_4] : memref<144x32xf32, #tpu.memory_space<vmem>>, vector<32x4xf32>
    %c104 = arith.constant 104 : index
    %c0_5 = arith.constant 0 : index
    %5 = vector.load %arg2[%c104, %c0_5] : memref<144x32xf32, #tpu.memory_space<vmem>>, vector<4x32xf32>
    %c112 = arith.constant 112 : index
    %c0_6 = arith.constant 0 : index
    %6 = vector.load %arg2[%c112, %c0_6] : memref<144x32xf32, #tpu.memory_space<vmem>>, vector<32x4xf32>
    %c0_7 = arith.constant 0 : index
    %c0_8 = arith.constant 0 : index
    %7 = vector.load %arg0[%c0_7, %c0_8] : memref<16x1xi32, #tpu.memory_space<vmem>>, vector<16x1xi32>
    %8 = tpu.iota {dimensions = array<i32: 1>} : vector<16x16xi32>
    %9 = vector.broadcast %7 : vector<16x1xi32> to vector<16x16xi32>
    %10 = arith.cmpi eq, %9, %8 : vector<16x16xi32>
    %cst = arith.constant 1.000000e+00 : f32
    %cst_9 = arith.constant 0.000000e+00 : f32
    %11 = vector.broadcast %cst : f32 to vector<16x16xf32>
    %12 = vector.broadcast %cst_9 : f32 to vector<16x16xf32>
    %13 = arith.select %10, %11, %12 : vector<16x16xi1>, vector<16x16xf32>
    %cst_10 = arith.constant dense<0.000000e+00> : vector<16x32xf32>
    %14 = tpu.matmul %13, %0, %cst_10 {dimension_numbers = #tpu.dot_dimension_numbers<[1], [0], [0], [1], [0, 0, 1, 1], [], []>} : vector<16x16xf32>, vector<16x32xf32>, vector<16x32xf32> -> vector<16x32xf32>
    %15 = arith.addf %14, %1 : vector<16x32xf32>
    %c0_11 = arith.constant 0 : index
    %c0_12 = arith.constant 0 : index
    %c0_13 = arith.constant 0 : index
    %16 = vector.load %arg1[%c0_11, %c0_12, %c0_13] : memref<2x168x96xf32, #tpu.memory_space<vmem>>, vector<1x32x96xf32>
    %17 = vector.shape_cast %16 : vector<1x32x96xf32> to vector<32x96xf32>
    %c0_14 = arith.constant 0 : index
    %c32_15 = arith.constant 32 : index
    %c0_16 = arith.constant 0 : index
    %18 = vector.load %arg1[%c0_14, %c32_15, %c0_16] : memref<2x168x96xf32, #tpu.memory_space<vmem>>, vector<1x32x32xf32>
    %19 = vector.shape_cast %18 : vector<1x32x32xf32> to vector<32x32xf32>
    %c0_17 = arith.constant 0 : index
    %c64_18 = arith.constant 64 : index
    %c0_19 = arith.constant 0 : index
    %20 = vector.load %arg1[%c0_17, %c64_18, %c0_19] : memref<2x168x96xf32, #tpu.memory_space<vmem>>, vector<1x32x64xf32>
    %21 = vector.shape_cast %20 : vector<1x32x64xf32> to vector<32x64xf32>
    %c0_20 = arith.constant 0 : index
    %c96 = arith.constant 96 : index
    %c0_21 = arith.constant 0 : index
    %22 = vector.load %arg1[%c0_20, %c96, %c0_21] : memref<2x168x96xf32, #tpu.memory_space<vmem>>, vector<1x64x32xf32>
    %23 = vector.shape_cast %22 : vector<1x64x32xf32> to vector<64x32xf32>
    %c0_22 = arith.constant 0 : index
    %c160 = arith.constant 160 : index
    %c0_23 = arith.constant 0 : index
    %24 = vector.load %arg1[%c0_22, %c160, %c0_23] : memref<2x168x96xf32, #tpu.memory_space<vmem>>, vector<1x1x96xf32>
    %25 = vector.shape_cast %24 : vector<1x1x96xf32> to vector<1x96xf32>
    %c0_24 = arith.constant 0 : index
    %c161 = arith.constant 161 : index
    %c0_25 = arith.constant 0 : index
    %26 = vector.load %arg1[%c0_24, %c161, %c0_25] : memref<2x168x96xf32, #tpu.memory_space<vmem>>, vector<1x1x32xf32>
    %27 = vector.shape_cast %26 : vector<1x1x32xf32> to vector<1x32xf32>
    %c0_26 = arith.constant 0 : index
    %c162 = arith.constant 162 : index
    %c0_27 = arith.constant 0 : index
    %28 = vector.load %arg1[%c0_26, %c162, %c0_27] : memref<2x168x96xf32, #tpu.memory_space<vmem>>, vector<1x1x32xf32>
    %29 = vector.shape_cast %28 : vector<1x1x32xf32> to vector<1x32xf32>
    %c0_28 = arith.constant 0 : index
    %c163 = arith.constant 163 : index
    %c0_29 = arith.constant 0 : index
    %30 = vector.load %arg1[%c0_28, %c163, %c0_29] : memref<2x168x96xf32, #tpu.memory_space<vmem>>, vector<1x1x32xf32>
    %31 = vector.shape_cast %30 : vector<1x1x32xf32> to vector<1x32xf32>
    %c0_30 = arith.constant 0 : index
    %c164 = arith.constant 164 : index
    %c0_31 = arith.constant 0 : index
    %32 = vector.load %arg1[%c0_30, %c164, %c0_31] : memref<2x168x96xf32, #tpu.memory_space<vmem>>, vector<1x1x32xf32>
    %33 = vector.shape_cast %32 : vector<1x1x32xf32> to vector<1x32xf32>
    %c0_32 = arith.constant 0 : index
    %c165 = arith.constant 165 : index
    %c0_33 = arith.constant 0 : index
    %34 = vector.load %arg1[%c0_32, %c165, %c0_33] : memref<2x168x96xf32, #tpu.memory_space<vmem>>, vector<1x1x32xf32>
    %35 = vector.shape_cast %34 : vector<1x1x32xf32> to vector<1x32xf32>
    %c0_34 = arith.constant 0 : index
    %c166 = arith.constant 166 : index
    %c0_35 = arith.constant 0 : index
    %36 = vector.load %arg1[%c0_34, %c166, %c0_35] : memref<2x168x96xf32, #tpu.memory_space<vmem>>, vector<1x1x64xf32>
    %37 = vector.shape_cast %36 : vector<1x1x64xf32> to vector<1x64xf32>
    %c0_36 = arith.constant 0 : index
    %c167 = arith.constant 167 : index
    %c0_37 = arith.constant 0 : index
    %38 = vector.load %arg1[%c0_36, %c167, %c0_37] : memref<2x168x96xf32, #tpu.memory_space<vmem>>, vector<1x1x32xf32>
    %39 = vector.shape_cast %38 : vector<1x1x32xf32> to vector<1x32xf32>
    %cst_38 = arith.constant dense<0.000000e+00> : vector<16x96xf32>
    %40 = tpu.matmul %15, %17, %cst_38 {dimension_numbers = #tpu.dot_dimension_numbers<[1], [0], [0], [1], [0, 0, 1, 1], [], []>} : vector<16x32xf32>, vector<32x96xf32>, vector<16x96xf32> -> vector<16x96xf32>
    %41 = vector.broadcast %25 : vector<1x96xf32> to vector<16x96xf32>
    %42 = arith.addf %40, %41 : vector<16x96xf32>
    %43 = vector.extract_strided_slice %42 {offsets = [0, 0], sizes = [16, 32], strides = [1, 1]} : vector<16x96xf32> to vector<16x32xf32>
    %44 = vector.shape_cast %43 : vector<16x32xf32> to vector<2x8x32xf32>
    %45 = vector.extract_strided_slice %42 {offsets = [0, 32], sizes = [16, 32], strides = [1, 1]} : vector<16x96xf32> to vector<16x32xf32>
    %46 = vector.shape_cast %45 : vector<16x32xf32> to vector<2x8x32xf32>
    %47 = vector.extract_strided_slice %42 {offsets = [0, 64], sizes = [16, 32], strides = [1, 1]} : vector<16x96xf32> to vector<16x32xf32>
    %48 = vector.shape_cast %47 : vector<16x32xf32> to vector<2x8x32xf32>
    %49 = vector.shape_cast %44 : vector<2x8x32xf32> to vector<2x1x8x32xf32>
    %50 = vector.shape_cast %46 : vector<2x8x32xf32> to vector<1x2x8x32xf32>
    %51 = vector.broadcast %49 : vector<2x1x8x32xf32> to vector<2x2x8x32xf32>
    %52 = vector.broadcast %50 : vector<1x2x8x32xf32> to vector<2x2x8x32xf32>
    %53 = arith.mulf %51, %52 : vector<2x2x8x32xf32>
    %54 = vector.shape_cast %53 : vector<2x2x8x32xf32> to vector<32x32xf32>
    %cst_39 = arith.constant dense<0.000000e+00> : vector<32x4xf32>
    %55 = tpu.matmul %54, %4, %cst_39 {dimension_numbers = #tpu.dot_dimension_numbers<[1], [0], [0], [1], [0, 0, 1, 1], [], []>} : vector<32x32xf32>, vector<32x4xf32>, vector<32x4xf32> -> vector<32x4xf32>
    %56 = arith.addf %55, %6 : vector<32x4xf32>
    %57 = vector.shape_cast %56 : vector<32x4xf32> to vector<2x2x8x4xf32>
    %cst_40 = arith.constant dense<0xFF800000> : vector<2x8x4xf32>
    %58 = vector.multi_reduction <maximumf>, %57, %cst_40 [1] : vector<2x2x8x4xf32> to vector<2x8x4xf32>
    %59 = vector.shape_cast %58 : vector<2x8x4xf32> to vector<2x1x8x4xf32>
    %60 = vector.broadcast %59 : vector<2x1x8x4xf32> to vector<2x2x8x4xf32>
    %61 = arith.subf %57, %60 : vector<2x2x8x4xf32>
    %62 = math.exp %61 : vector<2x2x8x4xf32>
    %cst_41 = arith.constant dense<0.000000e+00> : vector<2x8x4xf32>
    %63 = vector.multi_reduction <add>, %62, %cst_41 [1] : vector<2x2x8x4xf32> to vector<2x8x4xf32>
    %64 = vector.shape_cast %63 : vector<2x8x4xf32> to vector<2x1x8x4xf32>
    %65 = tpu.reciprocal %64 {approx = true} : vector<2x1x8x4xf32> -> vector<2x1x8x4xf32>
    %66 = vector.broadcast %65 : vector<2x1x8x4xf32> to vector<2x2x8x4xf32>
    %67 = arith.mulf %62, %66 : vector<2x2x8x4xf32>
    %68 = vector.shape_cast %67 : vector<2x2x8x4xf32> to vector<32x4xf32>
    %cst_42 = arith.constant dense<0.000000e+00> : vector<32x32xf32>
    %69 = tpu.matmul %68, %5, %cst_42 {dimension_numbers = #tpu.dot_dimension_numbers<[1], [0], [0], [1], [0, 0, 1, 1], [], []>} : vector<32x4xf32>, vector<4x32xf32>, vector<32x32xf32> -> vector<32x32xf32>
    %70 = vector.shape_cast %69 : vector<32x32xf32> to vector<2x2x8x32xf32>
    %71 = vector.shape_cast %48 : vector<2x8x32xf32> to vector<1x2x8x32xf32>
    %72 = vector.broadcast %71 : vector<1x2x8x32xf32> to vector<2x2x8x32xf32>
    %73 = arith.mulf %70, %72 : vector<2x2x8x32xf32>
    %cst_43 = arith.constant dense<0.000000e+00> : vector<2x8x32xf32>
    %74 = vector.multi_reduction <add>, %73, %cst_43 [1] : vector<2x2x8x32xf32> to vector<2x8x32xf32>
    %75 = vector.shape_cast %74 : vector<2x8x32xf32> to vector<16x32xf32>
    %cst_44 = arith.constant dense<0.000000e+00> : vector<16x32xf32>
    %76 = tpu.matmul %75, %19, %cst_44 {dimension_numbers = #tpu.dot_dimension_numbers<[1], [0], [0], [1], [0, 0, 1, 1], [], []>} : vector<16x32xf32>, vector<32x32xf32>, vector<16x32xf32> -> vector<16x32xf32>
    %77 = vector.broadcast %27 : vector<1x32xf32> to vector<16x32xf32>
    %78 = arith.addf %76, %77 : vector<16x32xf32>
    %79 = arith.addf %15, %78 : vector<16x32xf32>
    %cst_45 = arith.constant dense<0.000000e+00> : vector<16xf32>
    %80 = vector.multi_reduction <add>, %79, %cst_45 [1] : vector<16x32xf32> to vector<16xf32>
    %81 = vector.shape_cast %80 : vector<16xf32> to vector<16x1xf32>
    %cst_46 = arith.constant 3.200000e+01 : f32
    %82 = vector.broadcast %cst_46 : f32 to vector<16x1xf32>
    %83 = arith.divf %81, %82 : vector<16x1xf32>
    %84 = arith.mulf %79, %79 : vector<16x32xf32>
    %cst_47 = arith.constant dense<0.000000e+00> : vector<16xf32>
    %85 = vector.multi_reduction <add>, %84, %cst_47 [1] : vector<16x32xf32> to vector<16xf32>
    %86 = vector.shape_cast %85 : vector<16xf32> to vector<16x1xf32>
    %cst_48 = arith.constant 3.200000e+01 : f32
    %87 = vector.broadcast %cst_48 : f32 to vector<16x1xf32>
    %88 = arith.divf %86, %87 : vector<16x1xf32>
    %89 = arith.mulf %83, %83 : vector<16x1xf32>
    %90 = arith.subf %88, %89 : vector<16x1xf32>
    %91 = vector.broadcast %83 : vector<16x1xf32> to vector<16x32xf32>
    %92 = arith.subf %79, %91 : vector<16x32xf32>
    %cst_49 = arith.constant 9.99999974E-6 : f32
    %93 = vector.broadcast %cst_49 : f32 to vector<16x1xf32>
    %94 = arith.addf %90, %93 : vector<16x1xf32>
    %95 = math.rsqrt %94 : vector<16x1xf32>
    %96 = vector.broadcast %95 : vector<16x1xf32> to vector<16x32xf32>
    %97 = arith.mulf %92, %96 : vector<16x32xf32>
    %98 = vector.broadcast %29 : vector<1x32xf32> to vector<16x32xf32>
    %99 = arith.mulf %97, %98 : vector<16x32xf32>
    %100 = vector.broadcast %31 : vector<1x32xf32> to vector<16x32xf32>
    %101 = arith.addf %99, %100 : vector<16x32xf32>
    %cst_50 = arith.constant dense<0.000000e+00> : vector<16x64xf32>
    %102 = tpu.matmul %101, %21, %cst_50 {dimension_numbers = #tpu.dot_dimension_numbers<[1], [0], [0], [1], [0, 0, 1, 1], [], []>} : vector<16x32xf32>, vector<32x64xf32>, vector<16x64xf32> -> vector<16x64xf32>
    %103 = vector.broadcast %37 : vector<1x64xf32> to vector<16x64xf32>
    %104 = arith.addf %102, %103 : vector<16x64xf32>
    %cst_51 = arith.constant 0.000000e+00 : f32
    %105 = vector.broadcast %cst_51 : f32 to vector<16x64xf32>
    %106 = arith.maximumf %104, %105 : vector<16x64xf32>
    %cst_52 = arith.constant dense<0.000000e+00> : vector<16x32xf32>
    %107 = tpu.matmul %106, %23, %cst_52 {dimension_numbers = #tpu.dot_dimension_numbers<[1], [0], [0], [1], [0, 0, 1, 1], [], []>} : vector<16x64xf32>, vector<64x32xf32>, vector<16x32xf32> -> vector<16x32xf32>
    %108 = vector.broadcast %39 : vector<1x32xf32> to vector<16x32xf32>
    %109 = arith.addf %107, %108 : vector<16x32xf32>
    %110 = arith.addf %101, %109 : vector<16x32xf32>
    %cst_53 = arith.constant dense<0.000000e+00> : vector<16xf32>
    %111 = vector.multi_reduction <add>, %110, %cst_53 [1] : vector<16x32xf32> to vector<16xf32>
    %112 = vector.shape_cast %111 : vector<16xf32> to vector<16x1xf32>
    %cst_54 = arith.constant 3.200000e+01 : f32
    %113 = vector.broadcast %cst_54 : f32 to vector<16x1xf32>
    %114 = arith.divf %112, %113 : vector<16x1xf32>
    %115 = arith.mulf %110, %110 : vector<16x32xf32>
    %cst_55 = arith.constant dense<0.000000e+00> : vector<16xf32>
    %116 = vector.multi_reduction <add>, %115, %cst_55 [1] : vector<16x32xf32> to vector<16xf32>
    %117 = vector.shape_cast %116 : vector<16xf32> to vector<16x1xf32>
    %cst_56 = arith.constant 3.200000e+01 : f32
    %118 = vector.broadcast %cst_56 : f32 to vector<16x1xf32>
    %119 = arith.divf %117, %118 : vector<16x1xf32>
    %120 = arith.mulf %114, %114 : vector<16x1xf32>
    %121 = arith.subf %119, %120 : vector<16x1xf32>
    %122 = vector.broadcast %114 : vector<16x1xf32> to vector<16x32xf32>
    %123 = arith.subf %110, %122 : vector<16x32xf32>
    %cst_57 = arith.constant 9.99999974E-6 : f32
    %124 = vector.broadcast %cst_57 : f32 to vector<16x1xf32>
    %125 = arith.addf %121, %124 : vector<16x1xf32>
    %126 = math.rsqrt %125 : vector<16x1xf32>
    %127 = vector.broadcast %126 : vector<16x1xf32> to vector<16x32xf32>
    %128 = arith.mulf %123, %127 : vector<16x32xf32>
    %129 = vector.broadcast %33 : vector<1x32xf32> to vector<16x32xf32>
    %130 = arith.mulf %128, %129 : vector<16x32xf32>
    %131 = vector.broadcast %35 : vector<1x32xf32> to vector<16x32xf32>
    %132 = arith.addf %130, %131 : vector<16x32xf32>
    %c1 = arith.constant 1 : index
    %c0_58 = arith.constant 0 : index
    %c0_59 = arith.constant 0 : index
    %133 = vector.load %arg1[%c1, %c0_58, %c0_59] : memref<2x168x96xf32, #tpu.memory_space<vmem>>, vector<1x32x96xf32>
    %134 = vector.shape_cast %133 : vector<1x32x96xf32> to vector<32x96xf32>
    %c1_60 = arith.constant 1 : index
    %c32_61 = arith.constant 32 : index
    %c0_62 = arith.constant 0 : index
    %135 = vector.load %arg1[%c1_60, %c32_61, %c0_62] : memref<2x168x96xf32, #tpu.memory_space<vmem>>, vector<1x32x32xf32>
    %136 = vector.shape_cast %135 : vector<1x32x32xf32> to vector<32x32xf32>
    %c1_63 = arith.constant 1 : index
    %c64_64 = arith.constant 64 : index
    %c0_65 = arith.constant 0 : index
    %137 = vector.load %arg1[%c1_63, %c64_64, %c0_65] : memref<2x168x96xf32, #tpu.memory_space<vmem>>, vector<1x32x64xf32>
    %138 = vector.shape_cast %137 : vector<1x32x64xf32> to vector<32x64xf32>
    %c1_66 = arith.constant 1 : index
    %c96_67 = arith.constant 96 : index
    %c0_68 = arith.constant 0 : index
    %139 = vector.load %arg1[%c1_66, %c96_67, %c0_68] : memref<2x168x96xf32, #tpu.memory_space<vmem>>, vector<1x64x32xf32>
    %140 = vector.shape_cast %139 : vector<1x64x32xf32> to vector<64x32xf32>
    %c1_69 = arith.constant 1 : index
    %c160_70 = arith.constant 160 : index
    %c0_71 = arith.constant 0 : index
    %141 = vector.load %arg1[%c1_69, %c160_70, %c0_71] : memref<2x168x96xf32, #tpu.memory_space<vmem>>, vector<1x1x96xf32>
    %142 = vector.shape_cast %141 : vector<1x1x96xf32> to vector<1x96xf32>
    %c1_72 = arith.constant 1 : index
    %c161_73 = arith.constant 161 : index
    %c0_74 = arith.constant 0 : index
    %143 = vector.load %arg1[%c1_72, %c161_73, %c0_74] : memref<2x168x96xf32, #tpu.memory_space<vmem>>, vector<1x1x32xf32>
    %144 = vector.shape_cast %143 : vector<1x1x32xf32> to vector<1x32xf32>
    %c1_75 = arith.constant 1 : index
    %c162_76 = arith.constant 162 : index
    %c0_77 = arith.constant 0 : index
    %145 = vector.load %arg1[%c1_75, %c162_76, %c0_77] : memref<2x168x96xf32, #tpu.memory_space<vmem>>, vector<1x1x32xf32>
    %146 = vector.shape_cast %145 : vector<1x1x32xf32> to vector<1x32xf32>
    %c1_78 = arith.constant 1 : index
    %c163_79 = arith.constant 163 : index
    %c0_80 = arith.constant 0 : index
    %147 = vector.load %arg1[%c1_78, %c163_79, %c0_80] : memref<2x168x96xf32, #tpu.memory_space<vmem>>, vector<1x1x32xf32>
    %148 = vector.shape_cast %147 : vector<1x1x32xf32> to vector<1x32xf32>
    %c1_81 = arith.constant 1 : index
    %c164_82 = arith.constant 164 : index
    %c0_83 = arith.constant 0 : index
    %149 = vector.load %arg1[%c1_81, %c164_82, %c0_83] : memref<2x168x96xf32, #tpu.memory_space<vmem>>, vector<1x1x32xf32>
    %150 = vector.shape_cast %149 : vector<1x1x32xf32> to vector<1x32xf32>
    %c1_84 = arith.constant 1 : index
    %c165_85 = arith.constant 165 : index
    %c0_86 = arith.constant 0 : index
    %151 = vector.load %arg1[%c1_84, %c165_85, %c0_86] : memref<2x168x96xf32, #tpu.memory_space<vmem>>, vector<1x1x32xf32>
    %152 = vector.shape_cast %151 : vector<1x1x32xf32> to vector<1x32xf32>
    %c1_87 = arith.constant 1 : index
    %c166_88 = arith.constant 166 : index
    %c0_89 = arith.constant 0 : index
    %153 = vector.load %arg1[%c1_87, %c166_88, %c0_89] : memref<2x168x96xf32, #tpu.memory_space<vmem>>, vector<1x1x64xf32>
    %154 = vector.shape_cast %153 : vector<1x1x64xf32> to vector<1x64xf32>
    %c1_90 = arith.constant 1 : index
    %c167_91 = arith.constant 167 : index
    %c0_92 = arith.constant 0 : index
    %155 = vector.load %arg1[%c1_90, %c167_91, %c0_92] : memref<2x168x96xf32, #tpu.memory_space<vmem>>, vector<1x1x32xf32>
    %156 = vector.shape_cast %155 : vector<1x1x32xf32> to vector<1x32xf32>
    %cst_93 = arith.constant dense<0.000000e+00> : vector<16x96xf32>
    %157 = tpu.matmul %132, %134, %cst_93 {dimension_numbers = #tpu.dot_dimension_numbers<[1], [0], [0], [1], [0, 0, 1, 1], [], []>} : vector<16x32xf32>, vector<32x96xf32>, vector<16x96xf32> -> vector<16x96xf32>
    %158 = vector.broadcast %142 : vector<1x96xf32> to vector<16x96xf32>
    %159 = arith.addf %157, %158 : vector<16x96xf32>
    %160 = vector.extract_strided_slice %159 {offsets = [0, 0], sizes = [16, 32], strides = [1, 1]} : vector<16x96xf32> to vector<16x32xf32>
    %161 = vector.shape_cast %160 : vector<16x32xf32> to vector<2x8x32xf32>
    %162 = vector.extract_strided_slice %159 {offsets = [0, 32], sizes = [16, 32], strides = [1, 1]} : vector<16x96xf32> to vector<16x32xf32>
    %163 = vector.shape_cast %162 : vector<16x32xf32> to vector<2x8x32xf32>
    %164 = vector.extract_strided_slice %159 {offsets = [0, 64], sizes = [16, 32], strides = [1, 1]} : vector<16x96xf32> to vector<16x32xf32>
    %165 = vector.shape_cast %164 : vector<16x32xf32> to vector<2x8x32xf32>
    %166 = vector.shape_cast %161 : vector<2x8x32xf32> to vector<2x1x8x32xf32>
    %167 = vector.shape_cast %163 : vector<2x8x32xf32> to vector<1x2x8x32xf32>
    %168 = vector.broadcast %166 : vector<2x1x8x32xf32> to vector<2x2x8x32xf32>
    %169 = vector.broadcast %167 : vector<1x2x8x32xf32> to vector<2x2x8x32xf32>
    %170 = arith.mulf %168, %169 : vector<2x2x8x32xf32>
    %171 = vector.shape_cast %170 : vector<2x2x8x32xf32> to vector<32x32xf32>
    %cst_94 = arith.constant dense<0.000000e+00> : vector<32x4xf32>
    %172 = tpu.matmul %171, %4, %cst_94 {dimension_numbers = #tpu.dot_dimension_numbers<[1], [0], [0], [1], [0, 0, 1, 1], [], []>} : vector<32x32xf32>, vector<32x4xf32>, vector<32x4xf32> -> vector<32x4xf32>
    %173 = arith.addf %172, %6 : vector<32x4xf32>
    %174 = vector.shape_cast %173 : vector<32x4xf32> to vector<2x2x8x4xf32>
    %cst_95 = arith.constant dense<0xFF800000> : vector<2x8x4xf32>
    %175 = vector.multi_reduction <maximumf>, %174, %cst_95 [1] : vector<2x2x8x4xf32> to vector<2x8x4xf32>
    %176 = vector.shape_cast %175 : vector<2x8x4xf32> to vector<2x1x8x4xf32>
    %177 = vector.broadcast %176 : vector<2x1x8x4xf32> to vector<2x2x8x4xf32>
    %178 = arith.subf %174, %177 : vector<2x2x8x4xf32>
    %179 = math.exp %178 : vector<2x2x8x4xf32>
    %cst_96 = arith.constant dense<0.000000e+00> : vector<2x8x4xf32>
    %180 = vector.multi_reduction <add>, %179, %cst_96 [1] : vector<2x2x8x4xf32> to vector<2x8x4xf32>
    %181 = vector.shape_cast %180 : vector<2x8x4xf32> to vector<2x1x8x4xf32>
    %182 = tpu.reciprocal %181 {approx = true} : vector<2x1x8x4xf32> -> vector<2x1x8x4xf32>
    %183 = vector.broadcast %182 : vector<2x1x8x4xf32> to vector<2x2x8x4xf32>
    %184 = arith.mulf %179, %183 : vector<2x2x8x4xf32>
    %185 = vector.shape_cast %184 : vector<2x2x8x4xf32> to vector<32x4xf32>
    %cst_97 = arith.constant dense<0.000000e+00> : vector<32x32xf32>
    %186 = tpu.matmul %185, %5, %cst_97 {dimension_numbers = #tpu.dot_dimension_numbers<[1], [0], [0], [1], [0, 0, 1, 1], [], []>} : vector<32x4xf32>, vector<4x32xf32>, vector<32x32xf32> -> vector<32x32xf32>
    %187 = vector.shape_cast %186 : vector<32x32xf32> to vector<2x2x8x32xf32>
    %188 = vector.shape_cast %165 : vector<2x8x32xf32> to vector<1x2x8x32xf32>
    %189 = vector.broadcast %188 : vector<1x2x8x32xf32> to vector<2x2x8x32xf32>
    %190 = arith.mulf %187, %189 : vector<2x2x8x32xf32>
    %cst_98 = arith.constant dense<0.000000e+00> : vector<2x8x32xf32>
    %191 = vector.multi_reduction <add>, %190, %cst_98 [1] : vector<2x2x8x32xf32> to vector<2x8x32xf32>
    %192 = vector.shape_cast %191 : vector<2x8x32xf32> to vector<16x32xf32>
    %cst_99 = arith.constant dense<0.000000e+00> : vector<16x32xf32>
    %193 = tpu.matmul %192, %136, %cst_99 {dimension_numbers = #tpu.dot_dimension_numbers<[1], [0], [0], [1], [0, 0, 1, 1], [], []>} : vector<16x32xf32>, vector<32x32xf32>, vector<16x32xf32> -> vector<16x32xf32>
    %194 = vector.broadcast %144 : vector<1x32xf32> to vector<16x32xf32>
    %195 = arith.addf %193, %194 : vector<16x32xf32>
    %196 = arith.addf %132, %195 : vector<16x32xf32>
    %cst_100 = arith.constant dense<0.000000e+00> : vector<16xf32>
    %197 = vector.multi_reduction <add>, %196, %cst_100 [1] : vector<16x32xf32> to vector<16xf32>
    %198 = vector.shape_cast %197 : vector<16xf32> to vector<16x1xf32>
    %cst_101 = arith.constant 3.200000e+01 : f32
    %199 = vector.broadcast %cst_101 : f32 to vector<16x1xf32>
    %200 = arith.divf %198, %199 : vector<16x1xf32>
    %201 = arith.mulf %196, %196 : vector<16x32xf32>
    %cst_102 = arith.constant dense<0.000000e+00> : vector<16xf32>
    %202 = vector.multi_reduction <add>, %201, %cst_102 [1] : vector<16x32xf32> to vector<16xf32>
    %203 = vector.shape_cast %202 : vector<16xf32> to vector<16x1xf32>
    %cst_103 = arith.constant 3.200000e+01 : f32
    %204 = vector.broadcast %cst_103 : f32 to vector<16x1xf32>
    %205 = arith.divf %203, %204 : vector<16x1xf32>
    %206 = arith.mulf %200, %200 : vector<16x1xf32>
    %207 = arith.subf %205, %206 : vector<16x1xf32>
    %208 = vector.broadcast %200 : vector<16x1xf32> to vector<16x32xf32>
    %209 = arith.subf %196, %208 : vector<16x32xf32>
    %cst_104 = arith.constant 9.99999974E-6 : f32
    %210 = vector.broadcast %cst_104 : f32 to vector<16x1xf32>
    %211 = arith.addf %207, %210 : vector<16x1xf32>
    %212 = math.rsqrt %211 : vector<16x1xf32>
    %213 = vector.broadcast %212 : vector<16x1xf32> to vector<16x32xf32>
    %214 = arith.mulf %209, %213 : vector<16x32xf32>
    %215 = vector.broadcast %146 : vector<1x32xf32> to vector<16x32xf32>
    %216 = arith.mulf %214, %215 : vector<16x32xf32>
    %217 = vector.broadcast %148 : vector<1x32xf32> to vector<16x32xf32>
    %218 = arith.addf %216, %217 : vector<16x32xf32>
    %cst_105 = arith.constant dense<0.000000e+00> : vector<16x64xf32>
    %219 = tpu.matmul %218, %138, %cst_105 {dimension_numbers = #tpu.dot_dimension_numbers<[1], [0], [0], [1], [0, 0, 1, 1], [], []>} : vector<16x32xf32>, vector<32x64xf32>, vector<16x64xf32> -> vector<16x64xf32>
    %220 = vector.broadcast %154 : vector<1x64xf32> to vector<16x64xf32>
    %221 = arith.addf %219, %220 : vector<16x64xf32>
    %cst_106 = arith.constant 0.000000e+00 : f32
    %222 = vector.broadcast %cst_106 : f32 to vector<16x64xf32>
    %223 = arith.maximumf %221, %222 : vector<16x64xf32>
    %cst_107 = arith.constant dense<0.000000e+00> : vector<16x32xf32>
    %224 = tpu.matmul %223, %140, %cst_107 {dimension_numbers = #tpu.dot_dimension_numbers<[1], [0], [0], [1], [0, 0, 1, 1], [], []>} : vector<16x64xf32>, vector<64x32xf32>, vector<16x32xf32> -> vector<16x32xf32>
    %225 = vector.broadcast %156 : vector<1x32xf32> to vector<16x32xf32>
    %226 = arith.addf %224, %225 : vector<16x32xf32>
    %227 = arith.addf %218, %226 : vector<16x32xf32>
    %cst_108 = arith.constant dense<0.000000e+00> : vector<16xf32>
    %228 = vector.multi_reduction <add>, %227, %cst_108 [1] : vector<16x32xf32> to vector<16xf32>
    %229 = vector.shape_cast %228 : vector<16xf32> to vector<16x1xf32>
    %cst_109 = arith.constant 3.200000e+01 : f32
    %230 = vector.broadcast %cst_109 : f32 to vector<16x1xf32>
    %231 = arith.divf %229, %230 : vector<16x1xf32>
    %232 = arith.mulf %227, %227 : vector<16x32xf32>
    %cst_110 = arith.constant dense<0.000000e+00> : vector<16xf32>
    %233 = vector.multi_reduction <add>, %232, %cst_110 [1] : vector<16x32xf32> to vector<16xf32>
    %234 = vector.shape_cast %233 : vector<16xf32> to vector<16x1xf32>
    %cst_111 = arith.constant 3.200000e+01 : f32
    %235 = vector.broadcast %cst_111 : f32 to vector<16x1xf32>
    %236 = arith.divf %234, %235 : vector<16x1xf32>
    %237 = arith.mulf %231, %231 : vector<16x1xf32>
    %238 = arith.subf %236, %237 : vector<16x1xf32>
    %239 = vector.broadcast %231 : vector<16x1xf32> to vector<16x32xf32>
    %240 = arith.subf %227, %239 : vector<16x32xf32>
    %cst_112 = arith.constant 9.99999974E-6 : f32
    %241 = vector.broadcast %cst_112 : f32 to vector<16x1xf32>
    %242 = arith.addf %238, %241 : vector<16x1xf32>
    %243 = math.rsqrt %242 : vector<16x1xf32>
    %244 = vector.broadcast %243 : vector<16x1xf32> to vector<16x32xf32>
    %245 = arith.mulf %240, %244 : vector<16x32xf32>
    %246 = vector.broadcast %150 : vector<1x32xf32> to vector<16x32xf32>
    %247 = arith.mulf %245, %246 : vector<16x32xf32>
    %248 = vector.broadcast %152 : vector<1x32xf32> to vector<16x32xf32>
    %249 = arith.addf %247, %248 : vector<16x32xf32>
    %cst_113 = arith.constant dense<0.000000e+00> : vector<16x16xf32>
    %250 = tpu.matmul %249, %2, %cst_113 {dimension_numbers = #tpu.dot_dimension_numbers<[1], [0], [0], [1], [0, 0, 1, 1], [], []>} : vector<16x32xf32>, vector<32x16xf32>, vector<16x16xf32> -> vector<16x16xf32>
    %251 = vector.broadcast %3 : vector<1x16xf32> to vector<16x16xf32>
    %252 = arith.addf %250, %251 : vector<16x16xf32>
    %253 = vector.shape_cast %252 : vector<16x16xf32> to vector<2x8x16xf32>
    %cst_114 = arith.constant dense<0xFF800000> : vector<2x16xf32>
    %254 = vector.multi_reduction <maximumf>, %253, %cst_114 [1] : vector<2x8x16xf32> to vector<2x16xf32>
    %255 = vector.shape_cast %254 : vector<2x16xf32> to vector<2x1x16xf32>
    %256 = vector.broadcast %255 : vector<2x1x16xf32> to vector<2x8x16xf32>
    %257 = arith.subf %253, %256 : vector<2x8x16xf32>
    %258 = math.exp %257 : vector<2x8x16xf32>
    %cst_115 = arith.constant dense<0.000000e+00> : vector<2x16xf32>
    %259 = vector.multi_reduction <add>, %258, %cst_115 [1] : vector<2x8x16xf32> to vector<2x16xf32>
    %260 = vector.shape_cast %259 : vector<2x16xf32> to vector<2x1x16xf32>
    %261 = math.log %260 : vector<2x1x16xf32>
    %262 = vector.broadcast %261 : vector<2x1x16xf32> to vector<2x8x16xf32>
    %263 = arith.subf %257, %262 : vector<2x8x16xf32>
    %264 = vector.shape_cast %263 : vector<2x8x16xf32> to vector<16x16xf32>
    %c0_116 = arith.constant 0 : index
    %c0_117 = arith.constant 0 : index
    %265 = vector.load %arg3[%c0_116, %c0_117] : memref<16x16xf32, #tpu.memory_space<vmem>>, vector<16x16xf32>
    tpu.vector_store %arg3[%c0_116, %c0_117], %264 {strides = array<i32>} : memref<16x16xf32, #tpu.memory_space<vmem>>, vector<16x16xf32>,
    return
  }
}

</mosaic_0001>

<llo_original>
// kernel: generator_forward.1
$region0: #{generator_forward.1}
  #allocation0 [shape = 'u32[]', space=smem, size = 0x4, offset = 0x4, fixed_abs, tag = 'smem constant byte address 0x4 - core index']
  #allocation1 [shape = 'u32[144,128]{1,0:T(1,128)}', space=vmem, size = 0x12000, scoped, tag = 'internal scratch']
  %s0 = inlined_call_operand.vmem [shape: s32[16,1], index: 0, kind: input, shape index: {}]
  %s1 = inlined_call_operand.hbm [shape: f32[2,168,96], index: 1, kind: input, shape index: {}]
  %s2 = inlined_call_operand.vmem [shape: f32[144,32], index: 2, kind: input, shape index: {}]
  %s3 = inlined_call_operand.hbm [shape: f32[16,16], index: 3, kind: output, shape index: {}]
  %s4 = sld [smem:[#allocation0]]
  $region26: #{generator_forward.1} parent=0
    _
  %s6 = ssub.s32 1, %s4
  %s7 = scalar_select 0, %s6, %s4
  $region1: #{generator_forward.1} parent=0
    #allocation2 [shape = 'u8[172032]{0}', space=vmem, size = 0x2a000, scoped, tag = 'input window, operand 1, single buffered']
    #allocation3 [shape = 's32[1]{0}', space=sflag, size = 0x4, scoped, tag = 'scoped memory for generator_forward.1']
    #allocation4 [shape = 's32[1]{0}', space=sflag, size = 0x4, scoped, tag = 'scoped memory for generator_forward.1']
    #allocation5 [shape = 'u8[8192]{0}', space=vmem, size = 0x2000, scoped, tag = 'output window, operand 0, single buffered']
    %8 = vsyncpa [#allocation3], 0
    %9 = vsyncpa [#allocation4], 0
    // Predicated region
    $region2: #{generator_forward.1} parent=1 // pred_check
      _
    $region3: #{generator_forward.1} parent=1 // pred_check_branch
      %11 = sbr.rel (0) target = $region5
    $region4: #{generator_forward.1} parent=1 // pred_region
      _
    $region5: #{generator_forward.1} parent=1 // pred_fallthru
      _
    // Predicated region
    $region6: #{generator_forward.1} parent=1 // pred_check
      _
    $region7: #{generator_forward.1} parent=1 // pred_check_branch
      %13 = sbr.rel (0) target = $region9
    $region8: #{generator_forward.1} parent=1 // pred_region
      %s15 = ssub.s32 5376, 5376
      %16 = vsyncadd [#allocation3], %s15
      %s17 = sshll.u32 [#allocation2], 4
      %s18 = int_to_ptr.vmem [resolvable:$true] %s17
      %23 = dma.hbm_to_vmem [thread:$0]  %s1, 5376, %s18, [#allocation3], 128, 128, 8
    $region9: #{generator_forward.1} parent=1 // pred_fallthru
      _
    // Predicated region
    $region10: #{generator_forward.1} parent=1 // pred_check
      _
    $region11: #{generator_forward.1} parent=1 // pred_check_branch
      %25 = sbr.rel (0) target = $region13
    $region12: #{generator_forward.1} parent=1 // pred_region
      _
    $region13: #{generator_forward.1} parent=1 // pred_fallthru
      _
    // Predicated region
    $region14: #{generator_forward.1} parent=1 // pred_check
      _
    $region15: #{generator_forward.1} parent=1 // pred_check_branch
      %27 = sbr.rel (0) target = $region17
    $region16: #{generator_forward.1} parent=1 // pred_region
      %28 = dma.done [#allocation3], 5376
    $region17: #{generator_forward.1} parent=1 // pred_fallthru
      _
    %v29 = vld [vmem:[%s2] sm:$0xff]
    %v30 = vld [vmem:[%s2 + $0x8] sm:$0xff]
    %v31 = vld [vmem:[%s2 + $0x10] sm:$0xff]
    %v32 = vld [vmem:[%s2 + $0x18] sm:$0xff]
    %v33 = vld [vmem:[%s2 + $0x20] sm:$0xff]
    %v34 = vld [vmem:[%s2 + $0x28] sm:$0xff]
    %v35 = vld [vmem:[%s2 + $0x30] sm:$0xff]
    %v36 = vld [vmem:[%s2 + $0x38] sm:$0xff]
    %v37 = vld [vmem:[%s2 + $0x40] sm:$0x1]
    %v38 = vld [vmem:[%s2 + $0x48] sm:$0xff]
    %v39 = vld [vmem:[%s2 + $0x50] sm:$0xff]
    %v40 = vld [vmem:[%s2 + $0x58] sm:$0xff]
    %v41 = vld [vmem:[%s2 + $0x60] sm:$0xff]
    %v42 = vld [vmem:[%s2 + $0x68] sm:$0xf]
    %v43 = vld [vmem:[%s2 + $0x70] sm:$0xff]
    %v44 = vld [vmem:[%s2 + $0x78] sm:$0xff]
    %v45 = vld [vmem:[%s2 + $0x80] sm:$0xff]
    %v46 = vld [vmem:[%s2 + $0x88] sm:$0xff]
    %v47 = vld [vmem:[%s0] sm:$0xff]
    %v48 = vld [vmem:[%s0 + $0x8] sm:$0xff]
    %v49 = vlaneseq
    %v50 = vand.u32 %v49, 127
    %51 = vset.pattern.permute.xlu0 0
    %52 = vperm.xlu0 %51, %v47
    %v53 = vpop.permute.xlu0 %52
    %54 = vset.pattern.permute.xlu0 0
    %55 = vperm.xlu0 %54, %v48
    %v56 = vpop.permute.xlu0 %55
    %vm57 = vcmp.eq.s32.totalorder %v53, %v50
    %vm58 = vcmp.eq.s32.totalorder %v56, %v50
    %v59 = vsel %vm57, 1.0, 0.0
    %v60 = vsel %vm58, 1.0, 0.0
    %vm61 = vcmask 130048
    %v63 = vsel %vm61, %v59, 0
    %v66 = vsel %vm61, %v60, 0
    %68 = vmatprep.subr.mxu0 0.0
    %69 = vmatpush1.msra.mxu0 %v29
    %70 = vmatprep.subr.mxu0 0.0
    %71 = vmatpush1.msra.mxu0 %v30
    %72 = vmatprep.subr.mxu0 0.0
    %73 = vmatpush1.msra.mxu0 0.0
    %74 = vmatprep.subr.mxu0 0.0
    %75 = vmatpush1.msra.mxu0 0.0
    %76 = vmatprep.subr.mxu0 0.0
    %77 = vmatpush1.msra.mxu0 0.0
    %78 = vmatprep.subr.mxu0 0.0
    %79 = vmatpush1.msra.mxu0 0.0
    %80 = vmatprep.subr.mxu0 0.0
    %81 = vmatpush1.msra.mxu0 0.0
    %82 = vmatprep.subr.mxu0 0.0
    %83 = vmatpush1.msra.mxu0 0.0
    %84 = vmatprep.subr.mxu0 0.0
    %85 = vmatpush1.msra.mxu0 0.0
    %86 = vmatprep.subr.mxu0 0.0
    %87 = vmatpush1.msra.mxu0 0.0
    %88 = vmatprep.subr.mxu0 0.0
    %89 = vmatpush1.msra.mxu0 0.0
    %90 = vmatprep.subr.mxu0 0.0
    %91 = vmatpush1.msra.mxu0 0.0
    %92 = vmatprep.subr.mxu0 0.0
    %93 = vmatpush1.msra.mxu0 0.0
    %94 = vmatprep.subr.mxu0 0.0
    %95 = vmatpush1.msra.mxu0 0.0
    %96 = vmatprep.subr.mxu0 0.0
    %97 = vmatpush1.msra.mxu0 0.0
    %98 = vmatprep.subr.mxu0 0.0
    %99 = vmatpush1.msra.mxu0 0.0
    %100 = vmatprep.subr.mxu0 0.0
    %101 = vmatpush1.msra.mxu0 0.0
    %102 = vmatprep.subr.mxu0 0.0
    %103 = vmatpush1.msra.mxu0 0.0
    %104 = vmatprep.subr.mxu0 0.0
    %105 = vmatpush1.msra.mxu0 0.0
    %106 = vmatprep.subr.mxu0 0.0
    %107 = vmatpush1.msra.mxu0 0.0
    %108 = vmatprep.subr.mxu0 0.0
    %109 = vmatpush1.msra.mxu0 0.0
    %110 = vmatprep.subr.mxu0 0.0
    %111 = vmatpush1.msra.mxu0 0.0
    %112 = vmatprep.subr.mxu0 0.0
    %113 = vmatpush1.msra.mxu0 0.0
    %114 = vmatprep.subr.mxu0 0.0
    %115 = vmatpush1.msra.mxu0 0.0
    %116 = vmatprep.subr.mxu0 0.0
    %117 = vmatpush1.msra.mxu0 0.0
    %118 = vmatprep.subr.mxu0 0.0
    %119 = vmatpush1.msra.mxu0 0.0
    %120 = vmatprep.subr.mxu0 0.0
    %121 = vmatpush1.msra.mxu0 0.0
    %122 = vmatprep.subr.mxu0 0.0
    %123 = vmatpush1.msra.mxu0 0.0
    %124 = vmatprep.subr.mxu0 0.0
    %125 = vmatpush1.msra.mxu0 0.0
    %126 = vmatprep.subr.mxu0 0.0
    %127 = vmatpush1.msra.mxu0 0.0
    %128 = vmatprep.subr.mxu0 0.0
    %129 = vmatpush1.msra.mxu0 0.0
    %130 = vmatprep.subr.mxu0 0.0
    %131 = vmatpush1.msra.mxu0 0.0
    %132 = vmatprep.mubr.f32.mxu0 0.0
    %133 = vmatmul.mubr.f32.gmra.mrb[0].mxu0 %v63
    %v134 = vpop.f32.mrb[0].mxu0
    %v135 = vadd.f32 %v31, %v134
    %v136 = vpop.f32.mrb[0].mxu0
    %137 = vmatprep.mubr.f32.mxu0 0.0
    %138 = vmatmul.mubr.f32.gmra.mrb[0].mxu0 %v66
    %v139 = vpop.f32.mrb[0].mxu0
    %v140 = vadd.f32 %v32, %v139
    %v141 = vpop.f32.mrb[0].mxu0
    %142 = vdwg.mxu0
    %v143 = vld [vmem:[#allocation2] sm:$0xff]
    %v144 = vld [vmem:[#allocation2 + $0x8] sm:$0xff]
    %v145 = vld [vmem:[#allocation2 + $0x10] sm:$0xff]
    %v146 = vld [vmem:[#allocation2 + $0x18] sm:$0xff]
    %v147 = vld [vmem:[#allocation2 + $0x20] sm:$0xff]
    %v148 = vld [vmem:[#allocation2 + $0x28] sm:$0xff]
    %v149 = vld [vmem:[#allocation2 + $0x30] sm:$0xff]
    %v150 = vld [vmem:[#allocation2 + $0x38] sm:$0xff]
    %v151 = vld [vmem:[#allocation2 + $0x40] sm:$0xff]
    %v152 = vld [vmem:[#allocation2 + $0x48] sm:$0xff]
    %v153 = vld [vmem:[#allocation2 + $0x50] sm:$0xff]
    %v154 = vld [vmem:[#allocation2 + $0x58] sm:$0xff]
    %v155 = vld [vmem:[#allocation2 + $0x60] sm:$0xff]
    %v156 = vld [vmem:[#allocation2 + $0x68] sm:$0xff]
    %v157 = vld [vmem:[#allocation2 + $0x70] sm:$0xff]
    %v158 = vld [vmem:[#allocation2 + $0x78] sm:$0xff]
    %v159 = vld [vmem:[#allocation2 + $0x80] sm:$0xff]
    %v160 = vld [vmem:[#allocation2 + $0x88] sm:$0xff]
    %v161 = vld [vmem:[#allocation2 + $0x90] sm:$0xff]
    %v162 = vld [vmem:[#allocation2 + $0x98] sm:$0xff]
    %v163 = vld [vmem:[#allocation2 + $0xa0] sm:$0x1]
    %v164 = vld [vmem:[#allocation2 + $0xa1] sm:$0x1]
    %v165 = vld [vmem:[#allocation2 + $0xa2] sm:$0x1]
    %v166 = vld [vmem:[#allocation2 + $0xa3] sm:$0x1]
    %v167 = vld [vmem:[#allocation2 + $0xa4] sm:$0x1]
    %v168 = vld [vmem:[#allocation2 + $0xa5] sm:$0x1]
    %v169 = vld [vmem:[#allocation2 + $0xa6] sm:$0x1]
    %v170 = vld [vmem:[#allocation2 + $0xa7] sm:$0x1]
    %v171 = vlaneseq
    %v172 = vshrl.u32 %v171, 7
    %v173 = vsub.s32 0, %v172
    %v174 = vrot.slane %v163, %v173
    %vm175 = vcmask 261120
    %v177 = vsel %vm175, %v135, 0
    %v180 = vsel %vm175, %v140, 0
    %182 = vmatprep.subr.mxu0 0.0
    %183 = vmatpush1.msra.mxu0 %v143
    %184 = vmatprep.subr.mxu0 0.0
    %185 = vmatpush1.msra.mxu0 %v144
    %186 = vmatprep.subr.mxu0 0.0
    %187 = vmatpush1.msra.mxu0 %v145
    %188 = vmatprep.subr.mxu0 0.0
    %189 = vmatpush1.msra.mxu0 %v146
    %190 = vmatprep.subr.mxu0 0.0
    %191 = vmatpush1.msra.mxu0 0.0
    %192 = vmatprep.subr.mxu0 0.0
    %193 = vmatpush1.msra.mxu0 0.0
    %194 = vmatprep.subr.mxu0 0.0
    %195 = vmatpush1.msra.mxu0 0.0
    %196 = vmatprep.subr.mxu0 0.0
    %197 = vmatpush1.msra.mxu0 0.0
    %198 = vmatprep.subr.mxu0 0.0
    %199 = vmatpush1.msra.mxu0 0.0
    %200 = vmatprep.subr.mxu0 0.0
    %201 = vmatpush1.msra.mxu0 0.0
    %202 = vmatprep.subr.mxu0 0.0
    %203 = vmatpush1.msra.mxu0 0.0
    %204 = vmatprep.subr.mxu0 0.0
    %205 = vmatpush1.msra.mxu0 0.0
    %206 = vmatprep.subr.mxu0 0.0
    %207 = vmatpush1.msra.mxu0 0.0
    %208 = vmatprep.subr.mxu0 0.0
    %209 = vmatpush1.msra.mxu0 0.0
    %210 = vmatprep.subr.mxu0 0.0
    %211 = vmatpush1.msra.mxu0 0.0
    %212 = vmatprep.subr.mxu0 0.0
    %213 = vmatpush1.msra.mxu0 0.0
    %214 = vmatprep.subr.mxu0 0.0
    %215 = vmatpush1.msra.mxu0 0.0
    %216 = vmatprep.subr.mxu0 0.0
    %217 = vmatpush1.msra.mxu0 0.0
    %218 = vmatprep.subr.mxu0 0.0
    %219 = vmatpush1.msra.mxu0 0.0
    %220 = vmatprep.subr.mxu0 0.0
    %221 = vmatpush1.msra.mxu0 0.0
    %222 = vmatprep.subr.mxu0 0.0
    %223 = vmatpush1.msra.mxu0 0.0
    %224 = vmatprep.subr.mxu0 0.0
    %225 = vmatpush1.msra.mxu0 0.0
    %226 = vmatprep.subr.mxu0 0.0
    %227 = vmatpush1.msra.mxu0 0.0
    %228 = vmatprep.subr.mxu0 0.0
    %229 = vmatpush1.msra.mxu0 0.0
    %230 = vmatprep.subr.mxu0 0.0
    %231 = vmatpush1.msra.mxu0 0.0
    %232 = vmatprep.subr.mxu0 0.0
    %233 = vmatpush1.msra.mxu0 0.0
    %234 = vmatprep.subr.mxu0 0.0
    %235 = vmatpush1.msra.mxu0 0.0
    %236 = vmatprep.subr.mxu0 0.0
    %237 = vmatpush1.msra.mxu0 0.0
    %238 = vmatprep.subr.mxu0 0.0
    %239 = vmatpush1.msra.mxu0 0.0
    %240 = vmatprep.subr.mxu0 0.0
    %241 = vmatpush1.msra.mxu0 0.0
    %242 = vmatprep.subr.mxu0 0.0
    %243 = vmatpush1.msra.mxu0 0.0
    %244 = vmatprep.subr.mxu0 0.0
    %245 = vmatpush1.msra.mxu0 0.0
    %246 = vmatprep.mubr.f32.mxu0 0.0
    %247 = vmatmul.mubr.f32.gmra.mrb[0].mxu0 %v177
    %v248 = vpop.f32.mrb[0].mxu0
    %v249 = vadd.f32 %v174, %v248
    %v250 = vpop.f32.mrb[0].mxu0
    %251 = vmatprep.mubr.f32.mxu0 0.0
    %252 = vmatmul.mubr.f32.gmra.mrb[0].mxu0 %v180
    %v253 = vpop.f32.mrb[0].mxu0
    %v254 = vadd.f32 %v174, %v253
    %v255 = vpop.f32.mrb[0].mxu0
    %256 = vdwg.mxu0
    %259 = vrot.lane.b32.xlu0 %v249, 96
    %v260 = vpop.permute.xlu0 %259
    %261 = vrot.lane.b32.xlu0 %v254, 96
    %v262 = vpop.permute.xlu0 %261
    %v265 = vmul.f32 %v249, %v260
    %v266 = vmul.f32 %v249, %v262
    %v267 = vmul.f32 %v254, %v260
    %v268 = vmul.f32 %v254, %v262
    %v270 = vsel %vm175, %v265, 0
    %v273 = vsel %vm175, %v266, 0
    %v276 = vsel %vm175, %v267, 0
    %v279 = vsel %vm175, %v268, 0
    %281 = vmatprep.subr.mxu0 0.0
    %282 = vmatpush1.msra.mxu0 %v38
    %283 = vmatprep.subr.mxu0 0.0
    %284 = vmatpush1.msra.mxu0 %v39
    %285 = vmatprep.subr.mxu0 0.0
    %286 = vmatpush1.msra.mxu0 %v40
    %287 = vmatprep.subr.mxu0 0.0
    %288 = vmatpush1.msra.mxu0 %v41
    %289 = vmatprep.subr.mxu0 0.0
    %290 = vmatpush1.msra.mxu0 0.0
    %291 = vmatprep.subr.mxu0 0.0
    %292 = vmatpush1.msra.mxu0 0.0
    %293 = vmatprep.subr.mxu0 0.0
    %294 = vmatpush1.msra.mxu0 0.0
    %295 = vmatprep.subr.mxu0 0.0
    %296 = vmatpush1.msra.mxu0 0.0
    %297 = vmatprep.subr.mxu0 0.0
    %298 = vmatpush1.msra.mxu0 0.0
    %299 = vmatprep.subr.mxu0 0.0
    %300 = vmatpush1.msra.mxu0 0.0
    %301 = vmatprep.subr.mxu0 0.0
    %302 = vmatpush1.msra.mxu0 0.0
    %303 = vmatprep.subr.mxu0 0.0
    %304 = vmatpush1.msra.mxu0 0.0
    %305 = vmatprep.subr.mxu0 0.0
    %306 = vmatpush1.msra.mxu0 0.0
    %307 = vmatprep.subr.mxu0 0.0
    %308 = vmatpush1.msra.mxu0 0.0
    %309 = vmatprep.subr.mxu0 0.0
    %310 = vmatpush1.msra.mxu0 0.0
    %311 = vmatprep.subr.mxu0 0.0
    %312 = vmatpush1.msra.mxu0 0.0
    %313 = vmatprep.subr.mxu0 0.0
    %314 = vmatpush1.msra.mxu0 0.0
    %315 = vmatprep.subr.mxu0 0.0
    %316 = vmatpush1.msra.mxu0 0.0
    %317 = vmatprep.subr.mxu0 0.0
    %318 = vmatpush1.msra.mxu0 0.0
    %319 = vmatprep.subr.mxu0 0.0
    %320 = vmatpush1.msra.mxu0 0.0
    %321 = vmatprep.subr.mxu0 0.0
    %322 = vmatpush1.msra.mxu0 0.0
    %323 = vmatprep.subr.mxu0 0.0
    %324 = vmatpush1.msra.mxu0 0.0
    %325 = vmatprep.subr.mxu0 0.0
    %326 = vmatpush1.msra.mxu0 0.0
    %327 = vmatprep.subr.mxu0 0.0
    %328 = vmatpush1.msra.mxu0 0.0
    %329 = vmatprep.subr.mxu0 0.0
    %330 = vmatpush1.msra.mxu0 0.0
    %331 = vmatprep.subr.mxu0 0.0
    %332 = vmatpush1.msra.mxu0 0.0
    %333 = vmatprep.subr.mxu0 0.0
    %334 = vmatpush1.msra.mxu0 0.0
    %335 = vmatprep.subr.mxu0 0.0
    %336 = vmatpush1.msra.mxu0 0.0
    %337 = vmatprep.subr.mxu0 0.0
    %338 = vmatpush1.msra.mxu0 0.0
    %339 = vmatprep.subr.mxu0 0.0
    %340 = vmatpush1.msra.mxu0 0.0
    %341 = vmatprep.subr.mxu0 0.0
    %342 = vmatpush1.msra.mxu0 0.0
    %343 = vmatprep.subr.mxu0 0.0
    %344 = vmatpush1.msra.mxu0 0.0
    %345 = vmatprep.mubr.f32.mxu0 0.0
    %346 = vmatmul.mubr.f32.gmra.mrb[0].mxu0 %v270
    %v347 = vpop.f32.mrb[0].mxu0
    %v348 = vadd.f32 %v43, %v347
    %v349 = vpop.f32.mrb[0].mxu0
    %350 = vmatprep.mubr.f32.mxu0 0.0
    %351 = vmatmul.mubr.f32.gmra.mrb[0].mxu0 %v273
    %v352 = vpop.f32.mrb[0].mxu0
    %v353 = vadd.f32 %v44, %v352
    %v354 = vpop.f32.mrb[0].mxu0
    %355 = vmatprep.mubr.f32.mxu0 0.0
    %356 = vmatmul.mubr.f32.gmra.mrb[0].mxu0 %v276
    %v357 = vpop.f32.mrb[0].mxu0
    %v358 = vadd.f32 %v45, %v357
    %v359 = vpop.f32.mrb[0].mxu0
    %360 = vmatprep.mubr.f32.mxu0 0.0
    %361 = vmatmul.mubr.f32.gmra.mrb[0].mxu0 %v279
    %v362 = vpop.f32.mrb[0].mxu0
    %v363 = vadd.f32 %v46, %v362
    %v364 = vpop.f32.mrb[0].mxu0
    %365 = vdwg.mxu0
    %vm366 = vcmask 31744
    %v367 = vsel %vm366, %v348, -inf
    %v368 = vsel %vm366, %v353, -inf
    %v369 = vmax.f32 %v367, %v368
    %v370 = vsel %vm366, %v358, -inf
    %v371 = vsel %vm366, %v363, -inf
    %v372 = vmax.f32 %v370, %v371
    %v373 = vsub.f32 %v348, %v369
    %v374 = vsub.f32 %v353, %v369
    %v375 = vsub.f32 %v358, %v372
    %v376 = vsub.f32 %v363, %v372
    %v377 = vmul.f32 %v373, 1.442695
    %v378 = vpow.pop %v377
    %v379 = vmul.f32 %v374, 1.442695
    %v380 = vpow.pop %v379
    %v381 = vmul.f32 %v375, 1.442695
    %v382 = vpow.pop %v381
    %v383 = vmul.f32 %v376, 1.442695
    %v384 = vpow.pop %v383
    %v385 = vsel %vm366, %v378, 0.0
    %v386 = vsel %vm366, %v380, 0.0
    %v387 = vadd.f32 %v385, %v386
    %v388 = vsel %vm366, %v382, 0.0
    %v389 = vsel %vm366, %v384, 0.0
    %v390 = vadd.f32 %v388, %v389
    %v391 = vrcp.pop %v387
    %v392 = vrcp.pop %v390
    %v393 = vmul.f32 %v378, %v391
    %v394 = vmul.f32 %v380, %v391
    %v395 = vmul.f32 %v382, %v392
    %v396 = vmul.f32 %v384, %v392
    %v398 = vsel %vm366, %v393, 0
    %v401 = vsel %vm366, %v394, 0
    %v404 = vsel %vm366, %v395, 0
    %v407 = vsel %vm366, %v396, 0
    %vm409 = vcmask 1043456
    %v411 = vsel %vm409, %v42, 0
    %413 = vmatprep.subr.mxu0 0.0
    %414 = vmatpush1.msra.mxu0 %v411
    %415 = vmatprep.subr.mxu0 0.0
    %416 = vmatpush1.msra.mxu0 0.0
    %417 = vmatprep.subr.mxu0 0.0
    %418 = vmatpush1.msra.mxu0 0.0
    %419 = vmatprep.subr.mxu0 0.0
    %420 = vmatpush1.msra.mxu0 0.0
    %421 = vmatprep.subr.mxu0 0.0
    %422 = vmatpush1.msra.mxu0 0.0
    %423 = vmatprep.subr.mxu0 0.0
    %424 = vmatpush1.msra.mxu0 0.0
    %425 = vmatprep.subr.mxu0 0.0
    %426 = vmatpush1.msra.mxu0 0.0
    %427 = vmatprep.subr.mxu0 0.0
    %428 = vmatpush1.msra.mxu0 0.0
    %429 = vmatprep.subr.mxu0 0.0
    %430 = vmatpush1.msra.mxu0 0.0
    %431 = vmatprep.subr.mxu0 0.0
    %432 = vmatpush1.msra.mxu0 0.0
    %433 = vmatprep.subr.mxu0 0.0
    %434 = vmatpush1.msra.mxu0 0.0
    %435 = vmatprep.subr.mxu0 0.0
    %436 = vmatpush1.msra.mxu0 0.0
    %437 = vmatprep.subr.mxu0 0.0
    %438 = vmatpush1.msra.mxu0 0.0
    %439 = vmatprep.subr.mxu0 0.0
    %440 = vmatpush1.msra.mxu0 0.0
    %441 = vmatprep.subr.mxu0 0.0
    %442 = vmatpush1.msra.mxu0 0.0
    %443 = vmatprep.subr.mxu0 0.0
    %444 = vmatpush1.msra.mxu0 0.0
    %445 = vmatprep.subr.mxu0 0.0
    %446 = vmatpush1.msra.mxu0 0.0
    %447 = vmatprep.subr.mxu0 0.0
    %448 = vmatpush1.msra.mxu0 0.0
    %449 = vmatprep.subr.mxu0 0.0
    %450 = vmatpush1.msra.mxu0 0.0
    %451 = vmatprep.subr.mxu0 0.0
    %452 = vmatpush1.msra.mxu0 0.0
    %453 = vmatprep.subr.mxu0 0.0
    %454 = vmatpush1.msra.mxu0 0.0
    %455 = vmatprep.subr.mxu0 0.0
    %456 = vmatpush1.msra.mxu0 0.0
    %457 = vmatprep.subr.mxu0 0.0
    %458 = vmatpush1.msra.mxu0 0.0
    %459 = vmatprep.subr.mxu0 0.0
    %460 = vmatpush1.msra.mxu0 0.0
    %461 = vmatprep.subr.mxu0 0.0
    %462 = vmatpush1.msra.mxu0 0.0
    %463 = vmatprep.subr.mxu0 0.0
    %464 = vmatpush1.msra.mxu0 0.0
    %465 = vmatprep.subr.mxu0 0.0
    %466 = vmatpush1.msra.mxu0 0.0
    %467 = vmatprep.subr.mxu0 0.0
    %468 = vmatpush1.msra.mxu0 0.0
    %469 = vmatprep.subr.mxu0 0.0
    %470 = vmatpush1.msra.mxu0 0.0
    %471 = vmatprep.subr.mxu0 0.0
    %472 = vmatpush1.msra.mxu0 0.0
    %473 = vmatprep.subr.mxu0 0.0
    %474 = vmatpush1.msra.mxu0 0.0
    %475 = vmatprep.subr.mxu0 0.0
    %476 = vmatpush1.msra.mxu0 0.0
    %477 = vmatprep.mubr.f32.mxu0 0.0
    %478 = vmatmul.mubr.f32.gmra.mrb[0].mxu0 %v398
    %v479 = vpop.f32.mrb[0].mxu0
    %v480 = vadd.f32 0.0, %v479
    %v481 = vpop.f32.mrb[0].mxu0
    %482 = vmatprep.mubr.f32.mxu0 0.0
    %483 = vmatmul.mubr.f32.gmra.mrb[0].mxu0 %v401
    %v484 = vpop.f32.mrb[0].mxu0
    %v485 = vadd.f32 0.0, %v484
    %v486 = vpop.f32.mrb[0].mxu0
    %487 = vmatprep.mubr.f32.mxu0 0.0
    %488 = vmatmul.mubr.f32.gmra.mrb[0].mxu0 %v404
    %v489 = vpop.f32.mrb[0].mxu0
    %v490 = vadd.f32 0.0, %v489
    %v491 = vpop.f32.mrb[0].mxu0
    %492 = vmatprep.mubr.f32.mxu0 0.0
    %493 = vmatmul.mubr.f32.gmra.mrb[0].mxu0 %v407
    %v494 = vpop.f32.mrb[0].mxu0
    %v495 = vadd.f32 0.0, %v494
    %v496 = vpop.f32.mrb[0].mxu0
    %497 = vdwg.mxu0
    %498 = vrot.lane.b32.xlu0 %v249, 64
    %v499 = vpop.permute.xlu0 %498
    %500 = vrot.lane.b32.xlu0 %v254, 64
    %v501 = vpop.permute.xlu0 %500
    %v504 = vmul.f32 %v480, %v499
    %v505 = vmul.f32 %v485, %v501
    %v506 = vmul.f32 %v490, %v499
    %v507 = vmul.f32 %v495, %v501
    %v508 = vsel %vm175, %v504, 0.0
    %v509 = vsel %vm175, %v505, 0.0
    %v510 = vadd.f32 %v508, %v509
    %v511 = vsel %vm175, %v506, 0.0
    %v512 = vsel %vm175, %v507, 0.0
    %v513 = vadd.f32 %v511, %v512
    %v514 = vlaneseq
    %v515 = vshrl.u32 %v514, 7
    %v516 = vsub.s32 0, %v515
    %v517 = vrot.slane %v164, %v516
    %v519 = vsel %vm175, %v510, 0
    %v522 = vsel %vm175, %v513, 0
    %524 = vmatprep.subr.mxu0 0.0
    %525 = vmatpush1.msra.mxu0 %v147
    %526 = vmatprep.subr.mxu0 0.0
    %527 = vmatpush1.msra.mxu0 %v148
    %528 = vmatprep.subr.mxu0 0.0
    %529 = vmatpush1.msra.mxu0 %v149
    %530 = vmatprep.subr.mxu0 0.0
    %531 = vmatpush1.msra.mxu0 %v150
    %532 = vmatprep.subr.mxu0 0.0
    %533 = vmatpush1.msra.mxu0 0.0
    %534 = vmatprep.subr.mxu0 0.0
    %535 = vmatpush1.msra.mxu0 0.0
    %536 = vmatprep.subr.mxu0 0.0
    %537 = vmatpush1.msra.mxu0 0.0
    %538 = vmatprep.subr.mxu0 0.0
    %539 = vmatpush1.msra.mxu0 0.0
    %540 = vmatprep.subr.mxu0 0.0
    %541 = vmatpush1.msra.mxu0 0.0
    %542 = vmatprep.subr.mxu0 0.0
    %543 = vmatpush1.msra.mxu0 0.0
    %544 = vmatprep.subr.mxu0 0.0
    %545 = vmatpush1.msra.mxu0 0.0
    %546 = vmatprep.subr.mxu0 0.0
    %547 = vmatpush1.msra.mxu0 0.0
    %548 = vmatprep.subr.mxu0 0.0
    %549 = vmatpush1.msra.mxu0 0.0
    %550 = vmatprep.subr.mxu0 0.0
    %551 = vmatpush1.msra.mxu0 0.0
    %552 = vmatprep.subr.mxu0 0.0
    %553 = vmatpush1.msra.mxu0 0.0
    %554 = vmatprep.subr.mxu0 0.0
    %555 = vmatpush1.msra.mxu0 0.0
    %556 = vmatprep.subr.mxu0 0.0
    %557 = vmatpush1.msra.mxu0 0.0
    %558 = vmatprep.subr.mxu0 0.0
    %559 = vmatpush1.msra.mxu0 0.0
    %560 = vmatprep.subr.mxu0 0.0
    %561 = vmatpush1.msra.mxu0 0.0
    %562 = vmatprep.subr.mxu0 0.0
    %563 = vmatpush1.msra.mxu0 0.0
    %564 = vmatprep.subr.mxu0 0.0
    %565 = vmatpush1.msra.mxu0 0.0
    %566 = vmatprep.subr.mxu0 0.0
    %567 = vmatpush1.msra.mxu0 0.0
    %568 = vmatprep.subr.mxu0 0.0
    %569 = vmatpush1.msra.mxu0 0.0
    %570 = vmatprep.subr.mxu0 0.0
    %571 = vmatpush1.msra.mxu0 0.0
    %572 = vmatprep.subr.mxu0 0.0
    %573 = vmatpush1.msra.mxu0 0.0
    %574 = vmatprep.subr.mxu0 0.0
    %575 = vmatpush1.msra.mxu0 0.0
    %576 = vmatprep.subr.mxu0 0.0
    %577 = vmatpush1.msra.mxu0 0.0
    %578 = vmatprep.subr.mxu0 0.0
    %579 = vmatpush1.msra.mxu0 0.0
    %580 = vmatprep.subr.mxu0 0.0
    %581 = vmatpush1.msra.mxu0 0.0
    %582 = vmatprep.subr.mxu0 0.0
    %583 = vmatpush1.msra.mxu0 0.0
    %584 = vmatprep.subr.mxu0 0.0
    %585 = vmatpush1.msra.mxu0 0.0
    %586 = vmatprep.subr.mxu0 0.0
    %587 = vmatpush1.msra.mxu0 0.0
    %588 = vmatprep.mubr.f32.mxu0 0.0
    %589 = vmatmul.mubr.f32.gmra.mrb[0].mxu0 %v519
    %v590 = vpop.f32.mrb[0].mxu0
    %v591 = vadd.f32 %v517, %v590
    %v592 = vpop.f32.mrb[0].mxu0
    %593 = vmatprep.mubr.f32.mxu0 0.0
    %594 = vmatmul.mubr.f32.gmra.mrb[0].mxu0 %v522
    %v595 = vpop.f32.mrb[0].mxu0
    %v596 = vadd.f32 %v517, %v595
    %v597 = vpop.f32.mrb[0].mxu0
    %598 = vdwg.mxu0
    %v599 = vadd.f32 %v135, %v591
    %v600 = vadd.f32 %v140, %v596
    %v601 = vsel %vm175, %v599, 0.0
    %602 = vadd.xlane.f32.xlu0 %v601
    %v603 = vpop.xlane.xlu0 %602
    %v604 = vsel %vm175, %v600, 0.0
    %605 = vadd.xlane.f32.xlu0 %v604
    %v606 = vpop.xlane.xlu0 %605
    %v607 = vrcp.pop 32.0
    %v608 = vmul.f32 %v603, %v607
    %v609 = vmul.f32 %v606, %v607
    %v610 = vmul.f32 %v599, %v599
    %v611 = vmul.f32 %v600, %v600
    %v612 = vsel %vm175, %v610, 0.0
    %613 = vadd.xlane.f32.xlu0 %v612
    %v614 = vpop.xlane.xlu0 %613
    %v615 = vsel %vm175, %v611, 0.0
    %616 = vadd.xlane.f32.xlu0 %v615
    %v617 = vpop.xlane.xlu0 %616
    %v618 = vmul.f32 %v614, %v607
    %v619 = vmul.f32 %v617, %v607
    %v620 = vmul.f32 %v608, %v608
    %v621 = vmul.f32 %v609, %v609
    %v622 = vsub.f32 %v618, %v620
    %v623 = vsub.f32 %v619, %v621
    %v624 = vsub.f32 %v599, %v608
    %v625 = vsub.f32 %v600, %v609
    %v626 = vadd.f32 %v622, 1e-05
    %v627 = vadd.f32 %v623, 1e-05
    %v628 = vrsqrt.pop %v626
    %v629 = vrsqrt.pop %v627
    %v630 = vmul.f32 %v624, %v628
    %v631 = vmul.f32 %v625, %v629
    %v632 = vlaneseq
    %v633 = vshrl.u32 %v632, 7
    %v634 = vsub.s32 0, %v633
    %v635 = vrot.slane %v165, %v634
    %v636 = vmul.f32 %v630, %v635
    %v637 = vmul.f32 %v631, %v635
    %v638 = vlaneseq
    %v639 = vshrl.u32 %v638, 7
    %v640 = vsub.s32 0, %v639
    %v641 = vrot.slane %v166, %v640
    %v642 = vadd.f32 %v636, %v641
    %v643 = vadd.f32 %v637, %v641
    %v644 = vlaneseq
    %v645 = vshrl.u32 %v644, 7
    %v646 = vsub.s32 0, %v645
    %v647 = vrot.slane %v169, %v646
    %v649 = vsel %vm175, %v642, 0
    %v652 = vsel %vm175, %v643, 0
    %654 = vmatprep.subr.mxu0 0.0
    %655 = vmatpush1.msra.mxu0 %v151
    %656 = vmatprep.subr.mxu0 0.0
    %657 = vmatpush1.msra.mxu0 %v152
    %658 = vmatprep.subr.mxu0 0.0
    %659 = vmatpush1.msra.mxu0 %v153
    %660 = vmatprep.subr.mxu0 0.0
    %661 = vmatpush1.msra.mxu0 %v154
    %662 = vmatprep.subr.mxu0 0.0
    %663 = vmatpush1.msra.mxu0 0.0
    %664 = vmatprep.subr.mxu0 0.0
    %665 = vmatpush1.msra.mxu0 0.0
    %666 = vmatprep.subr.mxu0 0.0
    %667 = vmatpush1.msra.mxu0 0.0
    %668 = vmatprep.subr.mxu0 0.0
    %669 = vmatpush1.msra.mxu0 0.0
    %670 = vmatprep.subr.mxu0 0.0
    %671 = vmatpush1.msra.mxu0 0.0
    %672 = vmatprep.subr.mxu0 0.0
    %673 = vmatpush1.msra.mxu0 0.0
    %674 = vmatprep.subr.mxu0 0.0
    %675 = vmatpush1.msra.mxu0 0.0
    %676 = vmatprep.subr.mxu0 0.0
    %677 = vmatpush1.msra.mxu0 0.0
    %678 = vmatprep.subr.mxu0 0.0
    %679 = vmatpush1.msra.mxu0 0.0
    %680 = vmatprep.subr.mxu0 0.0
    %681 = vmatpush1.msra.mxu0 0.0
    %682 = vmatprep.subr.mxu0 0.0
    %683 = vmatpush1.msra.mxu0 0.0
    %684 = vmatprep.subr.mxu0 0.0
    %685 = vmatpush1.msra.mxu0 0.0
    %686 = vmatprep.subr.mxu0 0.0
    %687 = vmatpush1.msra.mxu0 0.0
    %688 = vmatprep.subr.mxu0 0.0
    %689 = vmatpush1.msra.mxu0 0.0
    %690 = vmatprep.subr.mxu0 0.0
    %691 = vmatpush1.msra.mxu0 0.0
    %692 = vmatprep.subr.mxu0 0.0
    %693 = vmatpush1.msra.mxu0 0.0
    %694 = vmatprep.subr.mxu0 0.0
    %695 = vmatpush1.msra.mxu0 0.0
    %696 = vmatprep.subr.mxu0 0.0
    %697 = vmatpush1.msra.mxu0 0.0
    %698 = vmatprep.subr.mxu0 0.0
    %699 = vmatpush1.msra.mxu0 0.0
    %700 = vmatprep.subr.mxu0 0.0
    %701 = vmatpush1.msra.mxu0 0.0
    %702 = vmatprep.subr.mxu0 0.0
    %703 = vmatpush1.msra.mxu0 0.0
    %704 = vmatprep.subr.mxu0 0.0
    %705 = vmatpush1.msra.mxu0 0.0
    %706 = vmatprep.subr.mxu0 0.0
    %707 = vmatpush1.msra.mxu0 0.0
    %708 = vmatprep.subr.mxu0 0.0
    %709 = vmatpush1.msra.mxu0 0.0
    %710 = vmatprep.subr.mxu0 0.0
    %711 = vmatpush1.msra.mxu0 0.0
    %712 = vmatprep.subr.mxu0 0.0
    %713 = vmatpush1.msra.mxu0 0.0
    %714 = vmatprep.subr.mxu0 0.0
    %715 = vmatpush1.msra.mxu0 0.0
    %716 = vmatprep.subr.mxu0 0.0
    %717 = vmatpush1.msra.mxu0 0.0
    %718 = vmatprep.mubr.f32.mxu0 0.0
    %719 = vmatmul.mubr.f32.gmra.mrb[0].mxu0 %v649
    %v720 = vpop.f32.mrb[0].mxu0
    %v721 = vadd.f32 %v647, %v720
    %v722 = vpop.f32.mrb[0].mxu0
    %723 = vmatprep.mubr.f32.mxu0 0.0
    %724 = vmatmul.mubr.f32.gmra.mrb[0].mxu0 %v652
    %v725 = vpop.f32.mrb[0].mxu0
    %v726 = vadd.f32 %v647, %v725
    %v727 = vpop.f32.mrb[0].mxu0
    %728 = vdwg.mxu0
    %v729 = vmax.f32 %v721, 0.0
    %v730 = vmax.f32 %v726, 0.0
    %v731 = vlaneseq
    %v732 = vshrl.u32 %v731, 7
    %v733 = vsub.s32 0, %v732
    %v734 = vrot.slane %v170, %v733
    %vm735 = vcmask 523264
    %v737 = vsel %vm735, %v729, 0
    %v740 = vsel %vm735, %v730, 0
    %742 = vmatprep.subr.mxu0 0.0
    %743 = vmatpush1.msra.mxu0 %v155
    %744 = vmatprep.subr.mxu0 0.0
    %745 = vmatpush1.msra.mxu0 %v156
    %746 = vmatprep.subr.mxu0 0.0
    %747 = vmatpush1.msra.mxu0 %v157
    %748 = vmatprep.subr.mxu0 0.0
    %749 = vmatpush1.msra.mxu0 %v158
    %750 = vmatprep.subr.mxu0 0.0
    %751 = vmatpush1.msra.mxu0 %v159
    %752 = vmatprep.subr.mxu0 0.0
    %753 = vmatpush1.msra.mxu0 %v160
    %754 = vmatprep.subr.mxu0 0.0
    %755 = vmatpush1.msra.mxu0 %v161
    %756 = vmatprep.subr.mxu0 0.0
    %757 = vmatpush1.msra.mxu0 %v162
    %758 = vmatprep.subr.mxu0 0.0
    %759 = vmatpush1.msra.mxu0 0.0
    %760 = vmatprep.subr.mxu0 0.0
    %761 = vmatpush1.msra.mxu0 0.0
    %762 = vmatprep.subr.mxu0 0.0
    %763 = vmatpush1.msra.mxu0 0.0
    %764 = vmatprep.subr.mxu0 0.0
    %765 = vmatpush1.msra.mxu0 0.0
    %766 = vmatprep.subr.mxu0 0.0
    %767 = vmatpush1.msra.mxu0 0.0
    %768 = vmatprep.subr.mxu0 0.0
    %769 = vmatpush1.msra.mxu0 0.0
    %770 = vmatprep.subr.mxu0 0.0
    %771 = vmatpush1.msra.mxu0 0.0
    %772 = vmatprep.subr.mxu0 0.0
    %773 = vmatpush1.msra.mxu0 0.0
    %774 = vmatprep.subr.mxu0 0.0
    %775 = vmatpush1.msra.mxu0 0.0
    %776 = vmatprep.subr.mxu0 0.0
    %777 = vmatpush1.msra.mxu0 0.0
    %778 = vmatprep.subr.mxu0 0.0
    %779 = vmatpush1.msra.mxu0 0.0
    %780 = vmatprep.subr.mxu0 0.0
    %781 = vmatpush1.msra.mxu0 0.0
    %782 = vmatprep.subr.mxu0 0.0
    %783 = vmatpush1.msra.mxu0 0.0
    %784 = vmatprep.subr.mxu0 0.0
    %785 = vmatpush1.msra.mxu0 0.0
    %786 = vmatprep.subr.mxu0 0.0
    %787 = vmatpush1.msra.mxu0 0.0
    %788 = vmatprep.subr.mxu0 0.0
    %789 = vmatpush1.msra.mxu0 0.0
    %790 = vmatprep.subr.mxu0 0.0
    %791 = vmatpush1.msra.mxu0 0.0
    %792 = vmatprep.subr.mxu0 0.0
    %793 = vmatpush1.msra.mxu0 0.0
    %794 = vmatprep.subr.mxu0 0.0
    %795 = vmatpush1.msra.mxu0 0.0
    %796 = vmatprep.subr.mxu0 0.0
    %797 = vmatpush1.msra.mxu0 0.0
    %798 = vmatprep.subr.mxu0 0.0
    %799 = vmatpush1.msra.mxu0 0.0
    %800 = vmatprep.subr.mxu0 0.0
    %801 = vmatpush1.msra.mxu0 0.0
    %802 = vmatprep.subr.mxu0 0.0
    %803 = vmatpush1.msra.mxu0 0.0
    %804 = vmatprep.subr.mxu0 0.0
    %805 = vmatpush1.msra.mxu0 0.0
    %806 = vmatprep.mubr.f32.mxu0 0.0
    %807 = vmatmul.mubr.f32.gmra.mrb[0].mxu0 %v737
    %v808 = vpop.f32.mrb[0].mxu0
    %v809 = vadd.f32 %v734, %v808
    %v810 = vpop.f32.mrb[0].mxu0
    %811 = vmatprep.mubr.f32.mxu0 0.0
    %812 = vmatmul.mubr.f32.gmra.mrb[0].mxu0 %v740
    %v813 = vpop.f32.mrb[0].mxu0
    %v814 = vadd.f32 %v734, %v813
    %v815 = vpop.f32.mrb[0].mxu0
    %816 = vdwg.mxu0
    %v817 = vadd.f32 %v642, %v809
    %v818 = vadd.f32 %v643, %v814
    %v819 = vsel %vm175, %v817, 0.0
    %820 = vadd.xlane.f32.xlu0 %v819
    %v821 = vpop.xlane.xlu0 %820
    %v822 = vsel %vm175, %v818, 0.0
    %823 = vadd.xlane.f32.xlu0 %v822
    %v824 = vpop.xlane.xlu0 %823
    %v825 = vmul.f32 %v821, %v607
    %v826 = vmul.f32 %v824, %v607
    %v827 = vmul.f32 %v817, %v817
    %v828 = vmul.f32 %v818, %v818
    %v829 = vsel %vm175, %v827, 0.0
    %830 = vadd.xlane.f32.xlu0 %v829
    %v831 = vpop.xlane.xlu0 %830
    %v832 = vsel %vm175, %v828, 0.0
    %833 = vadd.xlane.f32.xlu0 %v832
    %v834 = vpop.xlane.xlu0 %833
    %v835 = vmul.f32 %v831, %v607
    %v836 = vmul.f32 %v834, %v607
    %v837 = vmul.f32 %v825, %v825
    %v838 = vmul.f32 %v826, %v826
    %v839 = vsub.f32 %v835, %v837
    %v840 = vsub.f32 %v836, %v838
    %v841 = vsub.f32 %v817, %v825
    %v842 = vsub.f32 %v818, %v826
    %v843 = vadd.f32 %v839, 1e-05
    %v844 = vadd.f32 %v840, 1e-05
    %v845 = vrsqrt.pop %v843
    %v846 = vrsqrt.pop %v844
    %v847 = vmul.f32 %v841, %v845
    %v848 = vmul.f32 %v842, %v846
    %v849 = vlaneseq
    %v850 = vshrl.u32 %v849, 7
    %v851 = vsub.s32 0, %v850
    %v852 = vrot.slane %v167, %v851
    %v853 = vmul.f32 %v847, %v852
    %v854 = vmul.f32 %v848, %v852
    %v855 = vlaneseq
    %v856 = vshrl.u32 %v855, 7
    %v857 = vsub.s32 0, %v856
    %v858 = vrot.slane %v168, %v857
    %v859 = vadd.f32 %v853, %v858
    %v860 = vadd.f32 %v854, %v858
    %s861 = scalar_lea.vmem [#allocation2], 168
    %v862 = vld [vmem:[%s861] sm:$0xff]
    %v863 = vld [vmem:[%s861 + $0x8] sm:$0xff]
    %v864 = vld [vmem:[%s861 + $0x10] sm:$0xff]
    %v865 = vld [vmem:[%s861 + $0x18] sm:$0xff]
    %v866 = vld [vmem:[%s861 + $0x20] sm:$0xff]
    %v867 = vld [vmem:[%s861 + $0x28] sm:$0xff]
    %v868 = vld [vmem:[%s861 + $0x30] sm:$0xff]
    %v869 = vld [vmem:[%s861 + $0x38] sm:$0xff]
    %v870 = vld [vmem:[%s861 + $0x40] sm:$0xff]
    %v871 = vld [vmem:[%s861 + $0x48] sm:$0xff]
    %v872 = vld [vmem:[%s861 + $0x50] sm:$0xff]
    %v873 = vld [vmem:[%s861 + $0x58] sm:$0xff]
    %v874 = vld [vmem:[%s861 + $0x60] sm:$0xff]
    %v875 = vld [vmem:[%s861 + $0x68] sm:$0xff]
    %v876 = vld [vmem:[%s861 + $0x70] sm:$0xff]
    %v877 = vld [vmem:[%s861 + $0x78] sm:$0xff]
    %v878 = vld [vmem:[%s861 + $0x80] sm:$0xff]
    %v879 = vld [vmem:[%s861 + $0x88] sm:$0xff]
    %v880 = vld [vmem:[%s861 + $0x90] sm:$0xff]
    %v881 = vld [vmem:[%s861 + $0x98] sm:$0xff]
    %v882 = vld [vmem:[%s861 + $0xa0] sm:$0x1]
    %v883 = vld [vmem:[%s861 + $0xa1] sm:$0x1]
    %v884 = vld [vmem:[%s861 + $0xa2] sm:$0x1]
    %v885 = vld [vmem:[%s861 + $0xa3] sm:$0x1]
    %v886 = vld [vmem:[%s861 + $0xa4] sm:$0x1]
    %v887 = vld [vmem:[%s861 + $0xa5] sm:$0x1]
    %v888 = vld [vmem:[%s861 + $0xa6] sm:$0x1]
    %v889 = vld [vmem:[%s861 + $0xa7] sm:$0x1]
    %v890 = vlaneseq
    %v891 = vshrl.u32 %v890, 7
    %v892 = vsub.s32 0, %v891
    %v893 = vrot.slane %v882, %v892
    %v895 = vsel %vm175, %v859, 0
    %v898 = vsel %vm175, %v860, 0
    %900 = vmatprep.subr.mxu0 0.0
    %901 = vmatpush1.msra.mxu0 %v862
    %902 = vmatprep.subr.mxu0 0.0
    %903 = vmatpush1.msra.mxu0 %v863
    %904 = vmatprep.subr.mxu0 0.0
    %905 = vmatpush1.msra.mxu0 %v864
    %906 = vmatprep.subr.mxu0 0.0
    %907 = vmatpush1.msra.mxu0 %v865
    %908 = vmatprep.subr.mxu0 0.0
    %909 = vmatpush1.msra.mxu0 0.0
    %910 = vmatprep.subr.mxu0 0.0
    %911 = vmatpush1.msra.mxu0 0.0
    %912 = vmatprep.subr.mxu0 0.0
    %913 = vmatpush1.msra.mxu0 0.0
    %914 = vmatprep.subr.mxu0 0.0
    %915 = vmatpush1.msra.mxu0 0.0
    %916 = vmatprep.subr.mxu0 0.0
    %917 = vmatpush1.msra.mxu0 0.0
    %918 = vmatprep.subr.mxu0 0.0
    %919 = vmatpush1.msra.mxu0 0.0
    %920 = vmatprep.subr.mxu0 0.0
    %921 = vmatpush1.msra.mxu0 0.0
    %922 = vmatprep.subr.mxu0 0.0
    %923 = vmatpush1.msra.mxu0 0.0
    %924 = vmatprep.subr.mxu0 0.0
    %925 = vmatpush1.msra.mxu0 0.0
    %926 = vmatprep.subr.mxu0 0.0
    %927 = vmatpush1.msra.mxu0 0.0
    %928 = vmatprep.subr.mxu0 0.0
    %929 = vmatpush1.msra.mxu0 0.0
    %930 = vmatprep.subr.mxu0 0.0
    %931 = vmatpush1.msra.mxu0 0.0
    %932 = vmatprep.subr.mxu0 0.0
    %933 = vmatpush1.msra.mxu0 0.0
    %934 = vmatprep.subr.mxu0 0.0
    %935 = vmatpush1.msra.mxu0 0.0
    %936 = vmatprep.subr.mxu0 0.0
    %937 = vmatpush1.msra.mxu0 0.0
    %938 = vmatprep.subr.mxu0 0.0
    %939 = vmatpush1.msra.mxu0 0.0
    %940 = vmatprep.subr.mxu0 0.0
    %941 = vmatpush1.msra.mxu0 0.0
    %942 = vmatprep.subr.mxu0 0.0
    %943 = vmatpush1.msra.mxu0 0.0
    %944 = vmatprep.subr.mxu0 0.0
    %945 = vmatpush1.msra.mxu0 0.0
    %946 = vmatprep.subr.mxu0 0.0
    %947 = vmatpush1.msra.mxu0 0.0
    %948 = vmatprep.subr.mxu0 0.0
    %949 = vmatpush1.msra.mxu0 0.0
    %950 = vmatprep.subr.mxu0 0.0
    %951 = vmatpush1.msra.mxu0 0.0
    %952 = vmatprep.subr.mxu0 0.0
    %953 = vmatpush1.msra.mxu0 0.0
    %954 = vmatprep.subr.mxu0 0.0
    %955 = vmatpush1.msra.mxu0 0.0
    %956 = vmatprep.subr.mxu0 0.0
    %957 = vmatpush1.msra.mxu0 0.0
    %958 = vmatprep.subr.mxu0 0.0
    %959 = vmatpush1.msra.mxu0 0.0
    %960 = vmatprep.subr.mxu0 0.0
    %961 = vmatpush1.msra.mxu0 0.0
    %962 = vmatprep.subr.mxu0 0.0
    %963 = vmatpush1.msra.mxu0 0.0
    %964 = vmatprep.mubr.f32.mxu0 0.0
    %965 = vmatmul.mubr.f32.gmra.mrb[0].mxu0 %v895
    %v966 = vpop.f32.mrb[0].mxu0
    %v967 = vadd.f32 %v893, %v966
    %v968 = vpop.f32.mrb[0].mxu0
    %969 = vmatprep.mubr.f32.mxu0 0.0
    %970 = vmatmul.mubr.f32.gmra.mrb[0].mxu0 %v898
    %v971 = vpop.f32.mrb[0].mxu0
    %v972 = vadd.f32 %v893, %v971
    %v973 = vpop.f32.mrb[0].mxu0
    %974 = vdwg.mxu0
    %977 = vrot.lane.b32.xlu0 %v967, 96
    %v978 = vpop.permute.xlu0 %977
    %979 = vrot.lane.b32.xlu0 %v972, 96
    %v980 = vpop.permute.xlu0 %979
    %v983 = vmul.f32 %v967, %v978
    %v984 = vmul.f32 %v967, %v980
    %v985 = vmul.f32 %v972, %v978
    %v986 = vmul.f32 %v972, %v980
    %v988 = vsel %vm175, %v983, 0
    %v991 = vsel %vm175, %v984, 0
    %v994 = vsel %vm175, %v985, 0
    %v997 = vsel %vm175, %v986, 0
    %999 = vmatprep.subr.mxu0 0.0
    %1000 = vmatpush1.msra.mxu0 %v38
    %1001 = vmatprep.subr.mxu0 0.0
    %1002 = vmatpush1.msra.mxu0 %v39
    %1003 = vmatprep.subr.mxu0 0.0
    %1004 = vmatpush1.msra.mxu0 %v40
    %1005 = vmatprep.subr.mxu0 0.0
    %1006 = vmatpush1.msra.mxu0 %v41
    %1007 = vmatprep.subr.mxu0 0.0
    %1008 = vmatpush1.msra.mxu0 0.0
    %1009 = vmatprep.subr.mxu0 0.0
    %1010 = vmatpush1.msra.mxu0 0.0
    %1011 = vmatprep.subr.mxu0 0.0
    %1012 = vmatpush1.msra.mxu0 0.0
    %1013 = vmatprep.subr.mxu0 0.0
    %1014 = vmatpush1.msra.mxu0 0.0
    %1015 = vmatprep.subr.mxu0 0.0
    %1016 = vmatpush1.msra.mxu0 0.0
    %1017 = vmatprep.subr.mxu0 0.0
    %1018 = vmatpush1.msra.mxu0 0.0
    %1019 = vmatprep.subr.mxu0 0.0
    %1020 = vmatpush1.msra.mxu0 0.0
    %1021 = vmatprep.subr.mxu0 0.0
    %1022 = vmatpush1.msra.mxu0 0.0
    %1023 = vmatprep.subr.mxu0 0.0
    %1024 = vmatpush1.msra.mxu0 0.0
    %1025 = vmatprep.subr.mxu0 0.0
    %1026 = vmatpush1.msra.mxu0 0.0
    %1027 = vmatprep.subr.mxu0 0.0
    %1028 = vmatpush1.msra.mxu0 0.0
    %1029 = vmatprep.subr.mxu0 0.0
    %1030 = vmatpush1.msra.mxu0 0.0
    %1031 = vmatprep.subr.mxu0 0.0
    %1032 = vmatpush1.msra.mxu0 0.0
    %1033 = vmatprep.subr.mxu0 0.0
    %1034 = vmatpush1.msra.mxu0 0.0
    %1035 = vmatprep.subr.mxu0 0.0
    %1036 = vmatpush1.msra.mxu0 0.0
    %1037 = vmatprep.subr.mxu0 0.0
    %1038 = vmatpush1.msra.mxu0 0.0
    %1039 = vmatprep.subr.mxu0 0.0
    %1040 = vmatpush1.msra.mxu0 0.0
    %1041 = vmatprep.subr.mxu0 0.0
    %1042 = vmatpush1.msra.mxu0 0.0
    %1043 = vmatprep.subr.mxu0 0.0
    %1044 = vmatpush1.msra.mxu0 0.0
    %1045 = vmatprep.subr.mxu0 0.0
    %1046 = vmatpush1.msra.mxu0 0.0
    %1047 = vmatprep.subr.mxu0 0.0
    %1048 = vmatpush1.msra.mxu0 0.0
    %1049 = vmatprep.subr.mxu0 0.0
    %1050 = vmatpush1.msra.mxu0 0.0
    %1051 = vmatprep.subr.mxu0 0.0
    %1052 = vmatpush1.msra.mxu0 0.0
    %1053 = vmatprep.subr.mxu0 0.0
    %1054 = vmatpush1.msra.mxu0 0.0
    %1055 = vmatprep.subr.mxu0 0.0
    %1056 = vmatpush1.msra.mxu0 0.0
    %1057 = vmatprep.subr.mxu0 0.0
    %1058 = vmatpush1.msra.mxu0 0.0
    %1059 = vmatprep.subr.mxu0 0.0
    %1060 = vmatpush1.msra.mxu0 0.0
    %1061 = vmatprep.subr.mxu0 0.0
    %1062 = vmatpush1.msra.mxu0 0.0
    %1063 = vmatprep.mubr.f32.mxu0 0.0
    %1064 = vmatmul.mubr.f32.gmra.mrb[0].mxu0 %v988
    %v1065 = vpop.f32.mrb[0].mxu0
    %v1066 = vadd.f32 %v43, %v1065
    %v1067 = vpop.f32.mrb[0].mxu0
    %1068 = vmatprep.mubr.f32.mxu0 0.0
    %1069 = vmatmul.mubr.f32.gmra.mrb[0].mxu0 %v991
    %v1070 = vpop.f32.mrb[0].mxu0
    %v1071 = vadd.f32 %v44, %v1070
    %v1072 = vpop.f32.mrb[0].mxu0
    %1073 = vmatprep.mubr.f32.mxu0 0.0
    %1074 = vmatmul.mubr.f32.gmra.mrb[0].mxu0 %v994
    %v1075 = vpop.f32.mrb[0].mxu0
    %v1076 = vadd.f32 %v45, %v1075
    %v1077 = vpop.f32.mrb[0].mxu0
    %1078 = vmatprep.mubr.f32.mxu0 0.0
    %1079 = vmatmul.mubr.f32.gmra.mrb[0].mxu0 %v997
    %v1080 = vpop.f32.mrb[0].mxu0
    %v1081 = vadd.f32 %v46, %v1080
    %v1082 = vpop.f32.mrb[0].mxu0
    %1083 = vdwg.mxu0
    %v1084 = vsel %vm366, %v1066, -inf
    %v1085 = vsel %vm366, %v1071, -inf
    %v1086 = vmax.f32 %v1084, %v1085
    %v1087 = vsel %vm366, %v1076, -inf
    %v1088 = vsel %vm366, %v1081, -inf
    %v1089 = vmax.f32 %v1087, %v1088
    %v1090 = vsub.f32 %v1066, %v1086
    %v1091 = vsub.f32 %v1071, %v1086
    %v1092 = vsub.f32 %v1076, %v1089
    %v1093 = vsub.f32 %v1081, %v1089
    %v1094 = vmul.f32 %v1090, 1.442695
    %v1095 = vpow.pop %v1094
    %v1096 = vmul.f32 %v1091, 1.442695
    %v1097 = vpow.pop %v1096
    %v1098 = vmul.f32 %v1092, 1.442695
    %v1099 = vpow.pop %v1098
    %v1100 = vmul.f32 %v1093, 1.442695
    %v1101 = vpow.pop %v1100
    %v1102 = vsel %vm366, %v1095, 0.0
    %v1103 = vsel %vm366, %v1097, 0.0
    %v1104 = vadd.f32 %v1102, %v1103
    %v1105 = vsel %vm366, %v1099, 0.0
    %v1106 = vsel %vm366, %v1101, 0.0
    %v1107 = vadd.f32 %v1105, %v1106
    %v1108 = vrcp.pop %v1104
    %v1109 = vrcp.pop %v1107
    %v1110 = vmul.f32 %v1095, %v1108
    %v1111 = vmul.f32 %v1097, %v1108
    %v1112 = vmul.f32 %v1099, %v1109
    %v1113 = vmul.f32 %v1101, %v1109
    %v1115 = vsel %vm366, %v1110, 0
    %v1118 = vsel %vm366, %v1111, 0
    %v1121 = vsel %vm366, %v1112, 0
    %v1124 = vsel %vm366, %v1113, 0
    %1126 = vmatprep.subr.mxu0 0.0
    %1127 = vmatpush1.msra.mxu0 %v411
    %1128 = vmatprep.subr.mxu0 0.0
    %1129 = vmatpush1.msra.mxu0 0.0
    %1130 = vmatprep.subr.mxu0 0.0
    %1131 = vmatpush1.msra.mxu0 0.0
    %1132 = vmatprep.subr.mxu0 0.0
    %1133 = vmatpush1.msra.mxu0 0.0
    %1134 = vmatprep.subr.mxu0 0.0
    %1135 = vmatpush1.msra.mxu0 0.0
    %1136 = vmatprep.subr.mxu0 0.0
    %1137 = vmatpush1.msra.mxu0 0.0
    %1138 = vmatprep.subr.mxu0 0.0
    %1139 = vmatpush1.msra.mxu0 0.0
    %1140 = vmatprep.subr.mxu0 0.0
    %1141 = vmatpush1.msra.mxu0 0.0
    %1142 = vmatprep.subr.mxu0 0.0
    %1143 = vmatpush1.msra.mxu0 0.0
    %1144 = vmatprep.subr.mxu0 0.0
    %1145 = vmatpush1.msra.mxu0 0.0
    %1146 = vmatprep.subr.mxu0 0.0
    %1147 = vmatpush1.msra.mxu0 0.0
    %1148 = vmatprep.subr.mxu0 0.0
    %1149 = vmatpush1.msra.mxu0 0.0
    %1150 = vmatprep.subr.mxu0 0.0
    %1151 = vmatpush1.msra.mxu0 0.0
    %1152 = vmatprep.subr.mxu0 0.0
    %1153 = vmatpush1.msra.mxu0 0.0
    %1154 = vmatprep.subr.mxu0 0.0
    %1155 = vmatpush1.msra.mxu0 0.0
    %1156 = vmatprep.subr.mxu0 0.0
    %1157 = vmatpush1.msra.mxu0 0.0
    %1158 = vmatprep.subr.mxu0 0.0
    %1159 = vmatpush1.msra.mxu0 0.0
    %1160 = vmatprep.subr.mxu0 0.0
    %1161 = vmatpush1.msra.mxu0 0.0
    %1162 = vmatprep.subr.mxu0 0.0
    %1163 = vmatpush1.msra.mxu0 0.0
    %1164 = vmatprep.subr.mxu0 0.0
    %1165 = vmatpush1.msra.mxu0 0.0
    %1166 = vmatprep.subr.mxu0 0.0
    %1167 = vmatpush1.msra.mxu0 0.0
    %1168 = vmatprep.subr.mxu0 0.0
    %1169 = vmatpush1.msra.mxu0 0.0
    %1170 = vmatprep.subr.mxu0 0.0
    %1171 = vmatpush1.msra.mxu0 0.0
    %1172 = vmatprep.subr.mxu0 0.0
    %1173 = vmatpush1.msra.mxu0 0.0
    %1174 = vmatprep.subr.mxu0 0.0
    %1175 = vmatpush1.msra.mxu0 0.0
    %1176 = vmatprep.subr.mxu0 0.0
    %1177 = vmatpush1.msra.mxu0 0.0
    %1178 = vmatprep.subr.mxu0 0.0
    %1179 = vmatpush1.msra.mxu0 0.0
    %1180 = vmatprep.subr.mxu0 0.0
    %1181 = vmatpush1.msra.mxu0 0.0
    %1182 = vmatprep.subr.mxu0 0.0
    %1183 = vmatpush1.msra.mxu0 0.0
    %1184 = vmatprep.subr.mxu0 0.0
    %1185 = vmatpush1.msra.mxu0 0.0
    %1186 = vmatprep.subr.mxu0 0.0
    %1187 = vmatpush1.msra.mxu0 0.0
    %1188 = vmatprep.subr.mxu0 0.0
    %1189 = vmatpush1.msra.mxu0 0.0
    %1190 = vmatprep.mubr.f32.mxu0 0.0
    %1191 = vmatmul.mubr.f32.gmra.mrb[0].mxu0 %v1115
    %v1192 = vpop.f32.mrb[0].mxu0
    %v1193 = vadd.f32 0.0, %v1192
    %v1194 = vpop.f32.mrb[0].mxu0
    %1195 = vmatprep.mubr.f32.mxu0 0.0
    %1196 = vmatmul.mubr.f32.gmra.mrb[0].mxu0 %v1118
    %v1197 = vpop.f32.mrb[0].mxu0
    %v1198 = vadd.f32 0.0, %v1197
    %v1199 = vpop.f32.mrb[0].mxu0
    %1200 = vmatprep.mubr.f32.mxu0 0.0
    %1201 = vmatmul.mubr.f32.gmra.mrb[0].mxu0 %v1121
    %v1202 = vpop.f32.mrb[0].mxu0
    %v1203 = vadd.f32 0.0, %v1202
    %v1204 = vpop.f32.mrb[0].mxu0
    %1205 = vmatprep.mubr.f32.mxu0 0.0
    %1206 = vmatmul.mubr.f32.gmra.mrb[0].mxu0 %v1124
    %v1207 = vpop.f32.mrb[0].mxu0
    %v1208 = vadd.f32 0.0, %v1207
    %v1209 = vpop.f32.mrb[0].mxu0
    %1210 = vdwg.mxu0
    %1211 = vrot.lane.b32.xlu0 %v967, 64
    %v1212 = vpop.permute.xlu0 %1211
    %1213 = vrot.lane.b32.xlu0 %v972, 64
    %v1214 = vpop.permute.xlu0 %1213
    %v1217 = vmul.f32 %v1193, %v1212
    %v1218 = vmul.f32 %v1198, %v1214
    %v1219 = vmul.f32 %v1203, %v1212
    %v1220 = vmul.f32 %v1208, %v1214
    %v1221 = vsel %vm175, %v1217, 0.0
    %v1222 = vsel %vm175, %v1218, 0.0
    %v1223 = vadd.f32 %v1221, %v1222
    %v1224 = vsel %vm175, %v1219, 0.0
    %v1225 = vsel %vm175, %v1220, 0.0
    %v1226 = vadd.f32 %v1224, %v1225
    %v1227 = vlaneseq
    %v1228 = vshrl.u32 %v1227, 7
    %v1229 = vsub.s32 0, %v1228
    %v1230 = vrot.slane %v883, %v1229
    %v1232 = vsel %vm175, %v1223, 0
    %v1235 = vsel %vm175, %v1226, 0
    %1237 = vmatprep.subr.mxu0 0.0
    %1238 = vmatpush1.msra.mxu0 %v866
    %1239 = vmatprep.subr.mxu0 0.0
    %1240 = vmatpush1.msra.mxu0 %v867
    %1241 = vmatprep.subr.mxu0 0.0
    %1242 = vmatpush1.msra.mxu0 %v868
    %1243 = vmatprep.subr.mxu0 0.0
    %1244 = vmatpush1.msra.mxu0 %v869
    %1245 = vmatprep.subr.mxu0 0.0
    %1246 = vmatpush1.msra.mxu0 0.0
    %1247 = vmatprep.subr.mxu0 0.0
    %1248 = vmatpush1.msra.mxu0 0.0
    %1249 = vmatprep.subr.mxu0 0.0
    %1250 = vmatpush1.msra.mxu0 0.0
    %1251 = vmatprep.subr.mxu0 0.0
    %1252 = vmatpush1.msra.mxu0 0.0
    %1253 = vmatprep.subr.mxu0 0.0
    %1254 = vmatpush1.msra.mxu0 0.0
    %1255 = vmatprep.subr.mxu0 0.0
    %1256 = vmatpush1.msra.mxu0 0.0
    %1257 = vmatprep.subr.mxu0 0.0
    %1258 = vmatpush1.msra.mxu0 0.0
    %1259 = vmatprep.subr.mxu0 0.0
    %1260 = vmatpush1.msra.mxu0 0.0
    %1261 = vmatprep.subr.mxu0 0.0
    %1262 = vmatpush1.msra.mxu0 0.0
    %1263 = vmatprep.subr.mxu0 0.0
    %1264 = vmatpush1.msra.mxu0 0.0
    %1265 = vmatprep.subr.mxu0 0.0
    %1266 = vmatpush1.msra.mxu0 0.0
    %1267 = vmatprep.subr.mxu0 0.0
    %1268 = vmatpush1.msra.mxu0 0.0
    %1269 = vmatprep.subr.mxu0 0.0
    %1270 = vmatpush1.msra.mxu0 0.0
    %1271 = vmatprep.subr.mxu0 0.0
    %1272 = vmatpush1.msra.mxu0 0.0
    %1273 = vmatprep.subr.mxu0 0.0
    %1274 = vmatpush1.msra.mxu0 0.0
    %1275 = vmatprep.subr.mxu0 0.0
    %1276 = vmatpush1.msra.mxu0 0.0
    %1277 = vmatprep.subr.mxu0 0.0
    %1278 = vmatpush1.msra.mxu0 0.0
    %1279 = vmatprep.subr.mxu0 0.0
    %1280 = vmatpush1.msra.mxu0 0.0
    %1281 = vmatprep.subr.mxu0 0.0
    %1282 = vmatpush1.msra.mxu0 0.0
    %1283 = vmatprep.subr.mxu0 0.0
    %1284 = vmatpush1.msra.mxu0 0.0
    %1285 = vmatprep.subr.mxu0 0.0
    %1286 = vmatpush1.msra.mxu0 0.0
    %1287 = vmatprep.subr.mxu0 0.0
    %1288 = vmatpush1.msra.mxu0 0.0
    %1289 = vmatprep.subr.mxu0 0.0
    %1290 = vmatpush1.msra.mxu0 0.0
    %1291 = vmatprep.subr.mxu0 0.0
    %1292 = vmatpush1.msra.mxu0 0.0
    %1293 = vmatprep.subr.mxu0 0.0
    %1294 = vmatpush1.msra.mxu0 0.0
    %1295 = vmatprep.subr.mxu0 0.0
    %1296 = vmatpush1.msra.mxu0 0.0
    %1297 = vmatprep.subr.mxu0 0.0
    %1298 = vmatpush1.msra.mxu0 0.0
    %1299 = vmatprep.subr.mxu0 0.0
    %1300 = vmatpush1.msra.mxu0 0.0
    %1301 = vmatprep.mubr.f32.mxu0 0.0
    %1302 = vmatmul.mubr.f32.gmra.mrb[0].mxu0 %v1232
    %v1303 = vpop.f32.mrb[0].mxu0
    %v1304 = vadd.f32 %v1230, %v1303
    %v1305 = vpop.f32.mrb[0].mxu0
    %1306 = vmatprep.mubr.f32.mxu0 0.0
    %1307 = vmatmul.mubr.f32.gmra.mrb[0].mxu0 %v1235
    %v1308 = vpop.f32.mrb[0].mxu0
    %v1309 = vadd.f32 %v1230, %v1308
    %v1310 = vpop.f32.mrb[0].mxu0
    %1311 = vdwg.mxu0
    %v1312 = vadd.f32 %v859, %v1304
    %v1313 = vadd.f32 %v860, %v1309
    %v1314 = vsel %vm175, %v1312, 0.0
    %1315 = vadd.xlane.f32.xlu0 %v1314
    %v1316 = vpop.xlane.xlu0 %1315
    %v1317 = vsel %vm175, %v1313, 0.0
    %1318 = vadd.xlane.f32.xlu0 %v1317
    %v1319 = vpop.xlane.xlu0 %1318
    %v1320 = vmul.f32 %v1316, %v607
    %v1321 = vmul.f32 %v1319, %v607
    %v1322 = vmul.f32 %v1312, %v1312
    %v1323 = vmul.f32 %v1313, %v1313
    %v1324 = vsel %vm175, %v1322, 0.0
    %1325 = vadd.xlane.f32.xlu0 %v1324
    %v1326 = vpop.xlane.xlu0 %1325
    %v1327 = vsel %vm175, %v1323, 0.0
    %1328 = vadd.xlane.f32.xlu0 %v1327
    %v1329 = vpop.xlane.xlu0 %1328
    %v1330 = vmul.f32 %v1326, %v607
    %v1331 = vmul.f32 %v1329, %v607
    %v1332 = vmul.f32 %v1320, %v1320
    %v1333 = vmul.f32 %v1321, %v1321
    %v1334 = vsub.f32 %v1330, %v1332
    %v1335 = vsub.f32 %v1331, %v1333
    %v1336 = vsub.f32 %v1312, %v1320
    %v1337 = vsub.f32 %v1313, %v1321
    %v1338 = vadd.f32 %v1334, 1e-05
    %v1339 = vadd.f32 %v1335, 1e-05
    %v1340 = vrsqrt.pop %v1338
    %v1341 = vrsqrt.pop %v1339
    %v1342 = vmul.f32 %v1336, %v1340
    %v1343 = vmul.f32 %v1337, %v1341
    %v1344 = vlaneseq
    %v1345 = vshrl.u32 %v1344, 7
    %v1346 = vsub.s32 0, %v1345
    %v1347 = vrot.slane %v884, %v1346
    %v1348 = vmul.f32 %v1342, %v1347
    %v1349 = vmul.f32 %v1343, %v1347
    %v1350 = vlaneseq
    %v1351 = vshrl.u32 %v1350, 7
    %v1352 = vsub.s32 0, %v1351
    %v1353 = vrot.slane %v885, %v1352
    %v1354 = vadd.f32 %v1348, %v1353
    %v1355 = vadd.f32 %v1349, %v1353
    %v1356 = vlaneseq
    %v1357 = vshrl.u32 %v1356, 7
    %v1358 = vsub.s32 0, %v1357
    %v1359 = vrot.slane %v888, %v1358
    %v1361 = vsel %vm175, %v1354, 0
    %v1364 = vsel %vm175, %v1355, 0
    %1366 = vmatprep.subr.mxu0 0.0
    %1367 = vmatpush1.msra.mxu0 %v870
    %1368 = vmatprep.subr.mxu0 0.0
    %1369 = vmatpush1.msra.mxu0 %v871
    %1370 = vmatprep.subr.mxu0 0.0
    %1371 = vmatpush1.msra.mxu0 %v872
    %1372 = vmatprep.subr.mxu0 0.0
    %1373 = vmatpush1.msra.mxu0 %v873
    %1374 = vmatprep.subr.mxu0 0.0
    %1375 = vmatpush1.msra.mxu0 0.0
    %1376 = vmatprep.subr.mxu0 0.0
    %1377 = vmatpush1.msra.mxu0 0.0
    %1378 = vmatprep.subr.mxu0 0.0
    %1379 = vmatpush1.msra.mxu0 0.0
    %1380 = vmatprep.subr.mxu0 0.0
    %1381 = vmatpush1.msra.mxu0 0.0
    %1382 = vmatprep.subr.mxu0 0.0
    %1383 = vmatpush1.msra.mxu0 0.0
    %1384 = vmatprep.subr.mxu0 0.0
    %1385 = vmatpush1.msra.mxu0 0.0
    %1386 = vmatprep.subr.mxu0 0.0
    %1387 = vmatpush1.msra.mxu0 0.0
    %1388 = vmatprep.subr.mxu0 0.0
    %1389 = vmatpush1.msra.mxu0 0.0
    %1390 = vmatprep.subr.mxu0 0.0
    %1391 = vmatpush1.msra.mxu0 0.0
    %1392 = vmatprep.subr.mxu0 0.0
    %1393 = vmatpush1.msra.mxu0 0.0
    %1394 = vmatprep.subr.mxu0 0.0
    %1395 = vmatpush1.msra.mxu0 0.0
    %1396 = vmatprep.subr.mxu0 0.0
    %1397 = vmatpush1.msra.mxu0 0.0
    %1398 = vmatprep.subr.mxu0 0.0
    %1399 = vmatpush1.msra.mxu0 0.0
    %1400 = vmatprep.subr.mxu0 0.0
    %1401 = vmatpush1.msra.mxu0 0.0
    %1402 = vmatprep.subr.mxu0 0.0
    %1403 = vmatpush1.msra.mxu0 0.0
    %1404 = vmatprep.subr.mxu0 0.0
    %1405 = vmatpush1.msra.mxu0 0.0
    %1406 = vmatprep.subr.mxu0 0.0
    %1407 = vmatpush1.msra.mxu0 0.0
    %1408 = vmatprep.subr.mxu0 0.0
    %1409 = vmatpush1.msra.mxu0 0.0
    %1410 = vmatprep.subr.mxu0 0.0
    %1411 = vmatpush1.msra.mxu0 0.0
    %1412 = vmatprep.subr.mxu0 0.0
    %1413 = vmatpush1.msra.mxu0 0.0
    %1414 = vmatprep.subr.mxu0 0.0
    %1415 = vmatpush1.msra.mxu0 0.0
    %1416 = vmatprep.subr.mxu0 0.0
    %1417 = vmatpush1.msra.mxu0 0.0
    %1418 = vmatprep.subr.mxu0 0.0
    %1419 = vmatpush1.msra.mxu0 0.0
    %1420 = vmatprep.subr.mxu0 0.0
    %1421 = vmatpush1.msra.mxu0 0.0
    %1422 = vmatprep.subr.mxu0 0.0
    %1423 = vmatpush1.msra.mxu0 0.0
    %1424 = vmatprep.subr.mxu0 0.0
    %1425 = vmatpush1.msra.mxu0 0.0
    %1426 = vmatprep.subr.mxu0 0.0
    %1427 = vmatpush1.msra.mxu0 0.0
    %1428 = vmatprep.subr.mxu0 0.0
    %1429 = vmatpush1.msra.mxu0 0.0
    %1430 = vmatprep.mubr.f32.mxu0 0.0
    %1431 = vmatmul.mubr.f32.gmra.mrb[0].mxu0 %v1361
    %v1432 = vpop.f32.mrb[0].mxu0
    %v1433 = vadd.f32 %v1359, %v1432
    %v1434 = vpop.f32.mrb[0].mxu0
    %1435 = vmatprep.mubr.f32.mxu0 0.0
    %1436 = vmatmul.mubr.f32.gmra.mrb[0].mxu0 %v1364
    %v1437 = vpop.f32.mrb[0].mxu0
    %v1438 = vadd.f32 %v1359, %v1437
    %v1439 = vpop.f32.mrb[0].mxu0
    %1440 = vdwg.mxu0
    %v1441 = vmax.f32 %v1433, 0.0
    %v1442 = vmax.f32 %v1438, 0.0
    %v1443 = vlaneseq
    %v1444 = vshrl.u32 %v1443, 7
    %v1445 = vsub.s32 0, %v1444
    %v1446 = vrot.slane %v889, %v1445
    %v1448 = vsel %vm735, %v1441, 0
    %v1451 = vsel %vm735, %v1442, 0
    %1453 = vmatprep.subr.mxu0 0.0
    %1454 = vmatpush1.msra.mxu0 %v874
    %1455 = vmatprep.subr.mxu0 0.0
    %1456 = vmatpush1.msra.mxu0 %v875
    %1457 = vmatprep.subr.mxu0 0.0
    %1458 = vmatpush1.msra.mxu0 %v876
    %1459 = vmatprep.subr.mxu0 0.0
    %1460 = vmatpush1.msra.mxu0 %v877
    %1461 = vmatprep.subr.mxu0 0.0
    %1462 = vmatpush1.msra.mxu0 %v878
    %1463 = vmatprep.subr.mxu0 0.0
    %1464 = vmatpush1.msra.mxu0 %v879
    %1465 = vmatprep.subr.mxu0 0.0
    %1466 = vmatpush1.msra.mxu0 %v880
    %1467 = vmatprep.subr.mxu0 0.0
    %1468 = vmatpush1.msra.mxu0 %v881
    %1469 = vmatprep.subr.mxu0 0.0
    %1470 = vmatpush1.msra.mxu0 0.0
    %1471 = vmatprep.subr.mxu0 0.0
    %1472 = vmatpush1.msra.mxu0 0.0
    %1473 = vmatprep.subr.mxu0 0.0
    %1474 = vmatpush1.msra.mxu0 0.0
    %1475 = vmatprep.subr.mxu0 0.0
    %1476 = vmatpush1.msra.mxu0 0.0
    %1477 = vmatprep.subr.mxu0 0.0
    %1478 = vmatpush1.msra.mxu0 0.0
    %1479 = vmatprep.subr.mxu0 0.0
    %1480 = vmatpush1.msra.mxu0 0.0
    %1481 = vmatprep.subr.mxu0 0.0
    %1482 = vmatpush1.msra.mxu0 0.0
    %1483 = vmatprep.subr.mxu0 0.0
    %1484 = vmatpush1.msra.mxu0 0.0
    %1485 = vmatprep.subr.mxu0 0.0
    %1486 = vmatpush1.msra.mxu0 0.0
    %1487 = vmatprep.subr.mxu0 0.0
    %1488 = vmatpush1.msra.mxu0 0.0
    %1489 = vmatprep.subr.mxu0 0.0
    %1490 = vmatpush1.msra.mxu0 0.0
    %1491 = vmatprep.subr.mxu0 0.0
    %1492 = vmatpush1.msra.mxu0 0.0
    %1493 = vmatprep.subr.mxu0 0.0
    %1494 = vmatpush1.msra.mxu0 0.0
    %1495 = vmatprep.subr.mxu0 0.0
    %1496 = vmatpush1.msra.mxu0 0.0
    %1497 = vmatprep.subr.mxu0 0.0
    %1498 = vmatpush1.msra.mxu0 0.0
    %1499 = vmatprep.subr.mxu0 0.0
    %1500 = vmatpush1.msra.mxu0 0.0
    %1501 = vmatprep.subr.mxu0 0.0
    %1502 = vmatpush1.msra.mxu0 0.0
    %1503 = vmatprep.subr.mxu0 0.0
    %1504 = vmatpush1.msra.mxu0 0.0
    %1505 = vmatprep.subr.mxu0 0.0
    %1506 = vmatpush1.msra.mxu0 0.0
    %1507 = vmatprep.subr.mxu0 0.0
    %1508 = vmatpush1.msra.mxu0 0.0
    %1509 = vmatprep.subr.mxu0 0.0
    %1510 = vmatpush1.msra.mxu0 0.0
    %1511 = vmatprep.subr.mxu0 0.0
    %1512 = vmatpush1.msra.mxu0 0.0
    %1513 = vmatprep.subr.mxu0 0.0
    %1514 = vmatpush1.msra.mxu0 0.0
    %1515 = vmatprep.subr.mxu0 0.0
    %1516 = vmatpush1.msra.mxu0 0.0
    %1517 = vmatprep.mubr.f32.mxu0 0.0
    %1518 = vmatmul.mubr.f32.gmra.mrb[0].mxu0 %v1448
    %v1519 = vpop.f32.mrb[0].mxu0
    %v1520 = vadd.f32 %v1446, %v1519
    %v1521 = vpop.f32.mrb[0].mxu0
    %1522 = vmatprep.mubr.f32.mxu0 0.0
    %1523 = vmatmul.mubr.f32.gmra.mrb[0].mxu0 %v1451
    %v1524 = vpop.f32.mrb[0].mxu0
    %v1525 = vadd.f32 %v1446, %v1524
    %v1526 = vpop.f32.mrb[0].mxu0
    %1527 = vdwg.mxu0
    %v1528 = vadd.f32 %v1354, %v1520
    %v1529 = vadd.f32 %v1355, %v1525
    %v1530 = vsel %vm175, %v1528, 0.0
    %1531 = vadd.xlane.f32.xlu0 %v1530
    %v1532 = vpop.xlane.xlu0 %1531
    %v1533 = vsel %vm175, %v1529, 0.0
    %1534 = vadd.xlane.f32.xlu0 %v1533
    %v1535 = vpop.xlane.xlu0 %1534
    %v1536 = vmul.f32 %v1532, %v607
    %v1537 = vmul.f32 %v1535, %v607
    %v1538 = vmul.f32 %v1528, %v1528
    %v1539 = vmul.f32 %v1529, %v1529
    %v1540 = vsel %vm175, %v1538, 0.0
    %1541 = vadd.xlane.f32.xlu0 %v1540
    %v1542 = vpop.xlane.xlu0 %1541
    %v1543 = vsel %vm175, %v1539, 0.0
    %1544 = vadd.xlane.f32.xlu0 %v1543
    %v1545 = vpop.xlane.xlu0 %1544
    %v1546 = vmul.f32 %v1542, %v607
    %v1547 = vmul.f32 %v1545, %v607
    %v1548 = vmul.f32 %v1536, %v1536
    %v1549 = vmul.f32 %v1537, %v1537
    %v1550 = vsub.f32 %v1546, %v1548
    %v1551 = vsub.f32 %v1547, %v1549
    %v1552 = vsub.f32 %v1528, %v1536
    %v1553 = vsub.f32 %v1529, %v1537
    %v1554 = vadd.f32 %v1550, 1e-05
    %v1555 = vadd.f32 %v1551, 1e-05
    %v1556 = vrsqrt.pop %v1554
    %v1557 = vrsqrt.pop %v1555
    %v1558 = vmul.f32 %v1552, %v1556
    %v1559 = vmul.f32 %v1553, %v1557
    %v1560 = vlaneseq
    %v1561 = vshrl.u32 %v1560, 7
    %v1562 = vsub.s32 0, %v1561
    %v1563 = vrot.slane %v886, %v1562
    %v1564 = vmul.f32 %v1558, %v1563
    %v1565 = vmul.f32 %v1559, %v1563
    %v1566 = vlaneseq
    %v1567 = vshrl.u32 %v1566, 7
    %v1568 = vsub.s32 0, %v1567
    %v1569 = vrot.slane %v887, %v1568
    %v1570 = vadd.f32 %v1564, %v1569
    %v1571 = vadd.f32 %v1565, %v1569
    %v1572 = vlaneseq
    %v1573 = vshrl.u32 %v1572, 7
    %v1574 = vsub.s32 0, %v1573
    %v1575 = vrot.slane %v37, %v1574
    %v1577 = vsel %vm175, %v1570, 0
    %v1580 = vsel %vm175, %v1571, 0
    %1582 = vmatprep.subr.mxu0 0.0
    %1583 = vmatpush1.msra.mxu0 %v33
    %1584 = vmatprep.subr.mxu0 0.0
    %1585 = vmatpush1.msra.mxu0 %v34
    %1586 = vmatprep.subr.mxu0 0.0
    %1587 = vmatpush1.msra.mxu0 %v35
    %1588 = vmatprep.subr.mxu0 0.0
    %1589 = vmatpush1.msra.mxu0 %v36
    %1590 = vmatprep.subr.mxu0 0.0
    %1591 = vmatpush1.msra.mxu0 0.0
    %1592 = vmatprep.subr.mxu0 0.0
    %1593 = vmatpush1.msra.mxu0 0.0
    %1594 = vmatprep.subr.mxu0 0.0
    %1595 = vmatpush1.msra.mxu0 0.0
    %1596 = vmatprep.subr.mxu0 0.0
    %1597 = vmatpush1.msra.mxu0 0.0
    %1598 = vmatprep.subr.mxu0 0.0
    %1599 = vmatpush1.msra.mxu0 0.0
    %1600 = vmatprep.subr.mxu0 0.0
    %1601 = vmatpush1.msra.mxu0 0.0
    %1602 = vmatprep.subr.mxu0 0.0
    %1603 = vmatpush1.msra.mxu0 0.0
    %1604 = vmatprep.subr.mxu0 0.0
    %1605 = vmatpush1.msra.mxu0 0.0
    %1606 = vmatprep.subr.mxu0 0.0
    %1607 = vmatpush1.msra.mxu0 0.0
    %1608 = vmatprep.subr.mxu0 0.0
    %1609 = vmatpush1.msra.mxu0 0.0
    %1610 = vmatprep.subr.mxu0 0.0
    %1611 = vmatpush1.msra.mxu0 0.0
    %1612 = vmatprep.subr.mxu0 0.0
    %1613 = vmatpush1.msra.mxu0 0.0
    %1614 = vmatprep.subr.mxu0 0.0
    %1615 = vmatpush1.msra.mxu0 0.0
    %1616 = vmatprep.subr.mxu0 0.0
    %1617 = vmatpush1.msra.mxu0 0.0
    %1618 = vmatprep.subr.mxu0 0.0
    %1619 = vmatpush1.msra.mxu0 0.0
    %1620 = vmatprep.subr.mxu0 0.0
    %1621 = vmatpush1.msra.mxu0 0.0
    %1622 = vmatprep.subr.mxu0 0.0
    %1623 = vmatpush1.msra.mxu0 0.0
    %1624 = vmatprep.subr.mxu0 0.0
    %1625 = vmatpush1.msra.mxu0 0.0
    %1626 = vmatprep.subr.mxu0 0.0
    %1627 = vmatpush1.msra.mxu0 0.0
    %1628 = vmatprep.subr.mxu0 0.0
    %1629 = vmatpush1.msra.mxu0 0.0
    %1630 = vmatprep.subr.mxu0 0.0
    %1631 = vmatpush1.msra.mxu0 0.0
    %1632 = vmatprep.subr.mxu0 0.0
    %1633 = vmatpush1.msra.mxu0 0.0
    %1634 = vmatprep.subr.mxu0 0.0
    %1635 = vmatpush1.msra.mxu0 0.0
    %1636 = vmatprep.subr.mxu0 0.0
    %1637 = vmatpush1.msra.mxu0 0.0
    %1638 = vmatprep.subr.mxu0 0.0
    %1639 = vmatpush1.msra.mxu0 0.0
    %1640 = vmatprep.subr.mxu0 0.0
    %1641 = vmatpush1.msra.mxu0 0.0
    %1642 = vmatprep.subr.mxu0 0.0
    %1643 = vmatpush1.msra.mxu0 0.0
    %1644 = vmatprep.subr.mxu0 0.0
    %1645 = vmatpush1.msra.mxu0 0.0
    %1646 = vmatprep.mubr.f32.mxu0 0.0
    %1647 = vmatmul.mubr.f32.gmra.mrb[0].mxu0 %v1577
    %v1648 = vpop.f32.mrb[0].mxu0
    %v1649 = vadd.f32 %v1575, %v1648
    %v1650 = vpop.f32.mrb[0].mxu0
    %1651 = vmatprep.mubr.f32.mxu0 0.0
    %1652 = vmatmul.mubr.f32.gmra.mrb[0].mxu0 %v1580
    %v1653 = vpop.f32.mrb[0].mxu0
    %v1654 = vadd.f32 %v1575, %v1653
    %v1655 = vpop.f32.mrb[0].mxu0
    %1656 = vdwg.mxu0
    %v1657 = vsel %vm61, %v1649, -inf
    %v1658 = vrot.slane %v1657, 4
    %v1659 = vmax.f32 %v1657, %v1658
    %v1660 = vrot.slane %v1659, 2
    %v1661 = vmax.f32 %v1659, %v1660
    %v1662 = vrot.slane %v1661, 1
    %v1663 = vmax.f32 %v1661, %v1662
    %v1664 = vsel %vm61, %v1654, -inf
    %v1665 = vrot.slane %v1664, 4
    %v1666 = vmax.f32 %v1664, %v1665
    %v1667 = vrot.slane %v1666, 2
    %v1668 = vmax.f32 %v1666, %v1667
    %v1669 = vrot.slane %v1668, 1
    %v1670 = vmax.f32 %v1668, %v1669
    %v1671 = vsub.f32 %v1649, %v1663
    %v1672 = vsub.f32 %v1654, %v1670
    %v1673 = vmul.f32 %v1671, 1.442695
    %v1674 = vpow.pop %v1673
    %v1675 = vmul.f32 %v1672, 1.442695
    %v1676 = vpow.pop %v1675
    %v1677 = vsel %vm61, %v1674, 0.0
    %v1678 = vrot.slane %v1677, 4
    %v1679 = vadd.f32 %v1677, %v1678
    %v1680 = vrot.slane %v1679, 2
    %v1681 = vadd.f32 %v1679, %v1680
    %v1682 = vrot.slane %v1681, 1
    %v1683 = vadd.f32 %v1681, %v1682
    %v1684 = vsel %vm61, %v1676, 0.0
    %v1685 = vrot.slane %v1684, 4
    %v1686 = vadd.f32 %v1684, %v1685
    %v1687 = vrot.slane %v1686, 2
    %v1688 = vadd.f32 %v1686, %v1687
    %v1689 = vrot.slane %v1688, 1
    %v1690 = vadd.f32 %v1688, %v1689
    %v1691 = vlog2.pop %v1683
    %v1692 = vmul.f32 %v1691, 0.6931472
    %v1693 = vlog2.pop %v1690
    %v1694 = vmul.f32 %v1693, 0.6931472
    %v1695 = vsub.f32 %v1671, %v1692
    %v1696 = vsub.f32 %v1672, %v1694
    %1697 = vst.msk [vmem:[#allocation5] sm:$0xff] %vm61, %v1695
    %1698 = vst.msk [vmem:[#allocation5 + $0x8] sm:$0xff] %vm61, %v1696
    // Predicated region
    $region18: #{generator_forward.1} parent=1 // pred_check
      _
    $region19: #{generator_forward.1} parent=1 // pred_check_branch
      %1700 = sbr.rel (0) target = $region21
    $region20: #{generator_forward.1} parent=1 // pred_region
      %s1702 = ssub.s32 256, 256
      %1703 = vsyncadd [#allocation4], %s1702
      %s1704 = sshll.u32 [#allocation5], 4
      %s1705 = int_to_ptr.vmem [resolvable:$true] %s1704
      %1710 = dma.vmem_to_hbm [thread:$0]  %s1705, 256, %s3, [#allocation4], 128, 128, 8
    $region21: #{generator_forward.1} parent=1 // pred_fallthru
      _
    // Predicated region
    $region22: #{generator_forward.1} parent=1 // pred_check
      _
    $region23: #{generator_forward.1} parent=1 // pred_check_branch
      %1712 = sbr.rel (0) target = $region25
    $region24: #{generator_forward.1} parent=1 // pred_region
      %1713 = dma.done [#allocation4], 256
    $region25: #{generator_forward.1} parent=1 // pred_fallthru
      _
    %1714 = vsyncpa [#allocation3], 1
    %1715 = vsyncpa [#allocation4], 1

</llo_original>
